<compile_context>
chip_gen: v5e
topology: v5e:2x2
jax: 0.10.0
libtpu: 0.0.40
codegen_flags: <defaults>
</compile_context>

<pallas_src>
import jax
import jax.numpy as jnp
from jax.experimental import pallas as pl
from jax.experimental.pallas import tpu as pltpu

_N_STATS = 6                 # sum_q, sum_t, sum_qq, sum_tt, sum_qt, sum_(q-t)^2
_LANE = 128
_SUB = 8
_X_BLOCK_BYTES = 4 * 1024 * 1024     # streamed-x bytes per grid step (per buffer)
_MAX_ROWS = 8192                     # hard cap on sublane rows per block (~1M px)
_VMEM_LIMIT_BYTES = 48 * 1024 * 1024 # explicit scoped-VMEM limit (safe on v5e/v6e/v7x)


def _round_up(v, m):
    return ((v + m - 1) // m) * m


def _stats_kernel(x_ref, t_ref, w_ref, o_ref, acc_ref):
    """Fused 1x1 conv (bias folded out) + reduction statistics.

    x_ref  : (1, C, R, 128) input block, native dtype
    t_ref  : (1, 1, R, 128) (resized) target block, native dtype
    w_ref  : (C,) float32 conv weight in SMEM
    o_ref  : (1, 6, 8, 128) per-image partial-sum vregs (host reduces to scalars)
    acc_ref: (6, 8, 128) float32 VMEM accumulator (persists across HW tiles)
    """
    r = pl.program_id(1)

    @pl.when(r == 0)
    def _init():
        acc_ref[...] = jnp.zeros_like(acc_ref)

    C = x_ref.shape[1]
    R = x_ref.shape[2]

    # 1x1 conv as an unrolled VPU broadcast-MAC over channels (C is small);
    # per-channel cast keeps bf16 inputs streaming in their native dtype.
    q = w_ref[0] * x_ref[0, 0].astype(jnp.float32)
    for c in range(1, C):
        q = q + w_ref[c] * x_ref[0, c].astype(jnp.float32)
    t = t_ref[0, 0].astype(jnp.float32)
    d = q - t

    # Fold an (R,128) slab to a single dense (8,128) vreg via VALU adds
    # (reshape splits the sublane axis exactly on (8,128) tile boundaries).
    def fold(v):
        return jnp.sum(v.reshape(R // _SUB, _SUB, _LANE), axis=0)

    stats = (q, t, q * q, t * t, q * t, d * d)
    for i, v in enumerate(stats):            # static unroll; dense vreg RMWs only
        acc_ref[i] = acc_ref[i] + fold(v)

    @pl.when(r == pl.num_programs(1) - 1)
    def _finalize():
        o_ref[0] = acc_ref[...]


def _choose_rows(hw, c, itemsize):
    """Pick sublane rows per block so each x block is ~_X_BLOCK_BYTES."""
    rows_needed = _round_up(max(1, -(-hw // _LANE)), _SUB)
    cap = max(_SUB, (_X_BLOCK_BYTES // (c * _LANE * itemsize)) // _SUB * _SUB)
    rows = min(rows_needed, cap, _MAX_ROWS)
    n_tiles = -(-rows_needed // rows)
    rows = _round_up(-(-rows_needed // n_tiles), _SUB)   # even out block sizes
    return rows, n_tiles


def _branch_stats(x_nchw, t_nchw, w):
    """Per-image reduction sums for one loss branch.  Returns ((N,6) f32, HW)."""
    N, C, H, W = x_nchw.shape
    assert t_nchw.shape[0] == N and t_nchw.shape[1] == 1, "single-channel target assumed"
    HW = H * W
    itemsize = jnp.dtype(x_nchw.dtype).itemsize
    rows, n_tiles = _choose_rows(HW, C, itemsize)
    hw_pad = rows * n_tiles * _LANE

    x_r = x_nchw.reshape(N, C, HW)
    t_r = t_nchw.reshape(N, 1, HW)
    if hw_pad != HW:
        # Zero padding is exact: the bias is applied analytically on the host,
        # so padded pixels (x = 0, t = 0) contribute 0 to every accumulated sum.
        x_r = jnp.pad(x_r, ((0, 0), (0, 0), (0, hw_pad - HW)))
        t_r = jnp.pad(t_r, ((0, 0), (0, 0), (0, hw_pad - HW)))
    x_r = x_r.reshape(N, C, hw_pad // _LANE, _LANE)
    t_r = t_r.reshape(N, 1, hw_pad // _LANE, _LANE)

    # TODO(synk): for tiny HW, several images could share one grid step (and on
    # v7x a small-N call could split the HW reduction across the 2 TensorCores);
    # omitted for simplicity -- these branches are already overhead-dominated
    # only in the microsecond range.
    out = pl.pallas_call(
        _stats_kernel,
        out_shape=jax.ShapeDtypeStruct((N, _N_STATS, _SUB, _LANE), jnp.float32),
        grid=(N, n_tiles),
        in_specs=[
            pl.BlockSpec((1, C, rows, _LANE), lambda n, r: (n, 0, r, 0)),
            pl.BlockSpec((1, 1, rows, _LANE), lambda n, r: (n, 0, r, 0)),
            pl.BlockSpec(memory_space=pltpu.MemorySpace.SMEM),
        ],
        out_specs=pl.BlockSpec((1, _N_STATS, _SUB, _LANE),
                               lambda n, r: (n, 0, 0, 0)),
        scratch_shapes=[pltpu.VMEM((_N_STATS, _SUB, _LANE), jnp.float32)],
        compiler_params=pltpu.CompilerParams(
            dimension_semantics=("parallel", "arbitrary"),
            vmem_limit_bytes=_VMEM_LIMIT_BYTES),
    )(x_r, t_r, w.astype(jnp.float32).reshape(C))

    sums = jnp.sum(out, axis=(2, 3))          # (N, 6) final cross-lane reduce on host
    return sums, HW


def _loss_from_sums(sums, hw, bias):
    """MSE + SSIM-loss + Pearson-loss from per-image reduction sums (host glue).

    `bias` is the 1x1-conv bias folded out of the kernel: p = q + b, hence
    sum_p = sum_q + b*HW, sum_pp = sum_qq + 2b*sum_q + b^2*HW, sum_pt = sum_qt + b*sum_t.
    """
    sum_q, sum_t, sum_qq, sum_tt, sum_qt, sum_d2 = (sums[:, i] for i in range(_N_STATS))
    m = jnp.float32(hw)
    b = jnp.asarray(bias, jnp.float32)

    sum_p = sum_q + b * m
    sum_pp = sum_qq + 2.0 * b * sum_q + b * b * m
    sum_pt = sum_qt + b * sum_t

    mu_p, mu_t = sum_p / m, sum_t / m
    # Clamp: E[x^2]-E[x]^2 can go slightly negative in f32 for low-variance images.
    var_p = jnp.maximum(sum_pp / m - mu_p * mu_p, 0.0)
    var_t = jnp.maximum(sum_tt / m - mu_t * mu_t, 0.0)
    cov = sum_pt / m - mu_p * mu_t

    # MSE (nn.MSELoss mean reduction) from the directly accumulated sum (q-t)^2.
    sse = sum_d2 + 2.0 * b * (sum_q - sum_t) + b * b * m
    mse = jnp.sum(sse) / (jnp.float32(sums.shape[0]) * m)

    # SSIM (global statistics), loss = 1 - mean SSIM.
    # TODO(synk): exact SSIM window of helper.SSIM_loss unknown; using global stats.
    c1, c2 = 0.01 ** 2, 0.03 ** 2
    ssim = ((2.0 * mu_p * mu_t + c1) * (2.0 * cov + c2)) / (
        (mu_p * mu_p + mu_t * mu_t + c1) * (var_p + var_t + c2))
    ssim_loss = 1.0 - jnp.mean(ssim)

    # Pearson correlation loss = 1 - mean PCC.
    pcc = cov / jnp.sqrt(var_p * var_t + 1e-8)
    pcc_loss = 1.0 - jnp.mean(pcc)

    return mse + ssim_loss + pcc_loss


def _forward_impl(weights, biases, target, y, inputs):
    N, Ct = target.shape[0], target.shape[1]
    assert Ct == 1 and y.shape[1] == 1, "single-channel target / y assumed"
    l = jnp.float32(0.0)
    for i, x in enumerate(inputs):
        H, W = int(x.shape[2]), int(x.shape[3])
        # TODO(synk): torchvision bilinear resize approximated with jax.image.resize
        # (antialias not matched exactly); the separable resize could be fused into
        # the kernel to save an extra HBM pass over the target.
        t_res = jax.image.resize(target, (N, Ct, H, W), method="bilinear")
        sums, hw = _branch_stats(x, t_res, weights[i])
        l = l + _loss_from_sums(sums, hw, biases[i])
    # Final y-vs-target term: same kernel with w = [1], bias = 0 (no separate path).
    sums, hw = _branch_stats(y, target, jnp.ones((y.shape[1],), jnp.float32))
    l = l + _loss_from_sums(sums, hw, jnp.float32(0.0))
    return l


class LayerLossPallas:
    """JAX/Pallas equivalent of the PyTorch LayerLoss module."""

    def __init__(self, num_inputs, in_channels, key=None):
        assert len(in_channels) == num_inputs
        if key is None:
            key = jax.random.PRNGKey(0)
        self.weights, self.biases = [], []
        for c in in_channels:
            key, kw, kb = jax.random.split(key, 3)
            bound = 1.0 / (float(c) ** 0.5)   # PyTorch Conv2d default init range
            self.weights.append(
                jax.random.uniform(kw, (c,), jnp.float32, -bound, bound))
            self.biases.append(
                jax.random.uniform(kb, (), jnp.float32, -bound, bound))
        self._fwd = jax.jit(_forward_impl)

    def __call__(self, target, y, *inputs):
        return self._fwd(tuple(self.weights), tuple(self.biases),
                         target, y, tuple(inputs))


if __name__ == "__main__":
    key = jax.random.PRNGKey(0)
    k1, k2, k3, k4 = jax.random.split(key, 4)
    N = 2
    target = jax.random.uniform(k1, (N, 1, 16, 16), dtype=jnp.float32)
    y = jax.random.uniform(k2, (N, 1, 16, 16), dtype=jnp.float32)
    x0 = jax.random.normal(k3, (N, 4, 16, 16), dtype=jnp.float32)   # branch 0
    x1 = jax.random.normal(k4, (N, 8, 8, 8), dtype=jnp.float32)     # branch 1

    loss_mod = LayerLossPallas(num_inputs=2, in_channels=(4, 8))
    loss = loss_mod(target, y, x0, x1)
    loss = jax.block_until_ready(loss)
    assert loss.shape == () and bool(jnp.isfinite(loss))
    print("KERNEL_OK")
</pallas_src>

<mosaic_0001>
module attributes {stable_mosaic.version = 11 : i64} {
  func.func @_stats_kernel(%arg0: i32, %arg1: i32, %arg2: memref<1x8x8x128xf32, #tpu.memory_space<vmem>>, %arg3: memref<1x1x8x128xf32, #tpu.memory_space<vmem>>, %arg4: memref<8xf32, #tpu.memory_space<smem>>, %arg5: memref<1x6x8x128xf32, #tpu.memory_space<vmem>>, %arg6: memref<6x8x128xf32, #tpu.memory_space<vmem>>) attributes {dimension_semantics = [#tpu.dimension_semantics<parallel>, #tpu.dimension_semantics<arbitrary>], iteration_bounds = array<i64: 2, 1>, scalar_prefetch = 0 : i64, scratch_operands = 1 : i64, tpu.core_type = #tpu.core_type<tc>, window_params = [{transform_indices = @transform_0, window_bounds = array<i64: 1, 8, 8, 128>}, {transform_indices = @transform_1, window_bounds = array<i64: 1, 1, 8, 128>}, {transform_indices = @transform_2, window_bounds = array<i64: 8>}, {transform_indices = @transform_3, window_bounds = array<i64: 1, 6, 8, 128>}]} {
    %c0_i32 = arith.constant 0 : i32
    %0 = arith.cmpi eq, %arg1, %c0_i32 : i32
    %1 = arith.extui %0 : i1 to i32
    %c0_i32_0 = arith.constant 0 : i32
    %2 = arith.cmpi ne, %1, %c0_i32_0 : i32
    scf.if %2 {
      %cst_80 = arith.constant 0.000000e+00 : f32
      %108 = vector.broadcast %cst_80 : f32 to vector<6x8x128xf32>
      %c0_81 = arith.constant 0 : index
      %c0_82 = arith.constant 0 : index
      %c0_83 = arith.constant 0 : index
      %109 = vector.load %arg6[%c0_81, %c0_82, %c0_83] : memref<6x8x128xf32, #tpu.memory_space<vmem>>, vector<6x8x128xf32>
      tpu.vector_store %arg6[%c0_81, %c0_82, %c0_83], %108 {strides = array<i32>} : memref<6x8x128xf32, #tpu.memory_space<vmem>>, vector<6x8x128xf32>,
    } else {
    }
    %c0 = arith.constant 0 : index
    %3 = memref.load %arg4[%c0] : memref<8xf32, #tpu.memory_space<smem>>
    %c0_1 = arith.constant 0 : index
    %c0_2 = arith.constant 0 : index
    %c0_3 = arith.constant 0 : index
    %c0_4 = arith.constant 0 : index
    %4 = vector.load %arg2[%c0_1, %c0_2, %c0_3, %c0_4] : memref<1x8x8x128xf32, #tpu.memory_space<vmem>>, vector<1x1x8x128xf32>
    %5 = vector.shape_cast %4 : vector<1x1x8x128xf32> to vector<8x128xf32>
    %6 = vector.broadcast %3 : f32 to vector<8x128xf32>
    %7 = arith.mulf %6, %5 : vector<8x128xf32>
    %c1 = arith.constant 1 : index
    %8 = memref.load %arg4[%c1] : memref<8xf32, #tpu.memory_space<smem>>
    %c0_5 = arith.constant 0 : index
    %c1_6 = arith.constant 1 : index
    %c0_7 = arith.constant 0 : index
    %c0_8 = arith.constant 0 : index
    %9 = vector.load %arg2[%c0_5, %c1_6, %c0_7, %c0_8] : memref<1x8x8x128xf32, #tpu.memory_space<vmem>>, vector<1x1x8x128xf32>
    %10 = vector.shape_cast %9 : vector<1x1x8x128xf32> to vector<8x128xf32>
    %11 = vector.broadcast %8 : f32 to vector<8x128xf32>
    %12 = arith.mulf %11, %10 : vector<8x128xf32>
    %13 = arith.addf %7, %12 : vector<8x128xf32>
    %c2 = arith.constant 2 : index
    %14 = memref.load %arg4[%c2] : memref<8xf32, #tpu.memory_space<smem>>
    %c0_9 = arith.constant 0 : index
    %c2_10 = arith.constant 2 : index
    %c0_11 = arith.constant 0 : index
    %c0_12 = arith.constant 0 : index
    %15 = vector.load %arg2[%c0_9, %c2_10, %c0_11, %c0_12] : memref<1x8x8x128xf32, #tpu.memory_space<vmem>>, vector<1x1x8x128xf32>
    %16 = vector.shape_cast %15 : vector<1x1x8x128xf32> to vector<8x128xf32>
    %17 = vector.broadcast %14 : f32 to vector<8x128xf32>
    %18 = arith.mulf %17, %16 : vector<8x128xf32>
    %19 = arith.addf %13, %18 : vector<8x128xf32>
    %c3 = arith.constant 3 : index
    %20 = memref.load %arg4[%c3] : memref<8xf32, #tpu.memory_space<smem>>
    %c0_13 = arith.constant 0 : index
    %c3_14 = arith.constant 3 : index
    %c0_15 = arith.constant 0 : index
    %c0_16 = arith.constant 0 : index
    %21 = vector.load %arg2[%c0_13, %c3_14, %c0_15, %c0_16] : memref<1x8x8x128xf32, #tpu.memory_space<vmem>>, vector<1x1x8x128xf32>
    %22 = vector.shape_cast %21 : vector<1x1x8x128xf32> to vector<8x128xf32>
    %23 = vector.broadcast %20 : f32 to vector<8x128xf32>
    %24 = arith.mulf %23, %22 : vector<8x128xf32>
    %25 = arith.addf %19, %24 : vector<8x128xf32>
    %c4 = arith.constant 4 : index
    %26 = memref.load %arg4[%c4] : memref<8xf32, #tpu.memory_space<smem>>
    %c0_17 = arith.constant 0 : index
    %c4_18 = arith.constant 4 : index
    %c0_19 = arith.constant 0 : index
    %c0_20 = arith.constant 0 : index
    %27 = vector.load %arg2[%c0_17, %c4_18, %c0_19, %c0_20] : memref<1x8x8x128xf32, #tpu.memory_space<vmem>>, vector<1x1x8x128xf32>
    %28 = vector.shape_cast %27 : vector<1x1x8x128xf32> to vector<8x128xf32>
    %29 = vector.broadcast %26 : f32 to vector<8x128xf32>
    %30 = arith.mulf %29, %28 : vector<8x128xf32>
    %31 = arith.addf %25, %30 : vector<8x128xf32>
    %c5 = arith.constant 5 : index
    %32 = memref.load %arg4[%c5] : memref<8xf32, #tpu.memory_space<smem>>
    %c0_21 = arith.constant 0 : index
    %c5_22 = arith.constant 5 : index
    %c0_23 = arith.constant 0 : index
    %c0_24 = arith.constant 0 : index
    %33 = vector.load %arg2[%c0_21, %c5_22, %c0_23, %c0_24] : memref<1x8x8x128xf32, #tpu.memory_space<vmem>>, vector<1x1x8x128xf32>
    %34 = vector.shape_cast %33 : vector<1x1x8x128xf32> to vector<8x128xf32>
    %35 = vector.broadcast %32 : f32 to vector<8x128xf32>
    %36 = arith.mulf %35, %34 : vector<8x128xf32>
    %37 = arith.addf %31, %36 : vector<8x128xf32>
    %c6 = arith.constant 6 : index
    %38 = memref.load %arg4[%c6] : memref<8xf32, #tpu.memory_space<smem>>
    %c0_25 = arith.constant 0 : index
    %c6_26 = arith.constant 6 : index
    %c0_27 = arith.constant 0 : index
    %c0_28 = arith.constant 0 : index
    %39 = vector.load %arg2[%c0_25, %c6_26, %c0_27, %c0_28] : memref<1x8x8x128xf32, #tpu.memory_space<vmem>>, vector<1x1x8x128xf32>
    %40 = vector.shape_cast %39 : vector<1x1x8x128xf32> to vector<8x128xf32>
    %41 = vector.broadcast %38 : f32 to vector<8x128xf32>
    %42 = arith.mulf %41, %40 : vector<8x128xf32>
    %43 = arith.addf %37, %42 : vector<8x128xf32>
    %c7 = arith.constant 7 : index
    %44 = memref.load %arg4[%c7] : memref<8xf32, #tpu.memory_space<smem>>
    %c0_29 = arith.constant 0 : index
    %c7_30 = arith.constant 7 : index
    %c0_31 = arith.constant 0 : index
    %c0_32 = arith.constant 0 : index
    %45 = vector.load %arg2[%c0_29, %c7_30, %c0_31, %c0_32] : memref<1x8x8x128xf32, #tpu.memory_space<vmem>>, vector<1x1x8x128xf32>
    %46 = vector.shape_cast %45 : vector<1x1x8x128xf32> to vector<8x128xf32>
    %47 = vector.broadcast %44 : f32 to vector<8x128xf32>
    %48 = arith.mulf %47, %46 : vector<8x128xf32>
    %49 = arith.addf %43, %48 : vector<8x128xf32>
    %c0_33 = arith.constant 0 : index
    %c0_34 = arith.constant 0 : index
    %c0_35 = arith.constant 0 : index
    %c0_36 = arith.constant 0 : index
    %50 = vector.load %arg3[%c0_33, %c0_34, %c0_35, %c0_36] : memref<1x1x8x128xf32, #tpu.memory_space<vmem>>, vector<1x1x8x128xf32>
    %51 = vector.shape_cast %50 : vector<1x1x8x128xf32> to vector<8x128xf32>
    %52 = arith.subf %49, %51 : vector<8x128xf32>
    %53 = arith.mulf %49, %49 : vector<8x128xf32>
    %54 = arith.mulf %51, %51 : vector<8x128xf32>
    %55 = arith.mulf %49, %51 : vector<8x128xf32>
    %56 = arith.mulf %52, %52 : vector<8x128xf32>
    %c0_37 = arith.constant 0 : index
    %c0_38 = arith.constant 0 : index
    %c0_39 = arith.constant 0 : index
    %57 = vector.load %arg6[%c0_37, %c0_38, %c0_39] : memref<6x8x128xf32, #tpu.memory_space<vmem>>, vector<1x8x128xf32>
    %58 = vector.shape_cast %57 : vector<1x8x128xf32> to vector<8x128xf32>
    %59 = vector.shape_cast %49 : vector<8x128xf32> to vector<1x8x128xf32>
    %cst = arith.constant dense<0.000000e+00> : vector<8x128xf32>
    %60 = vector.multi_reduction <add>, %59, %cst [0] : vector<1x8x128xf32> to vector<8x128xf32>
    %61 = arith.addf %58, %60 : vector<8x128xf32>
    %c0_40 = arith.constant 0 : index
    %c0_41 = arith.constant 0 : index
    %c0_42 = arith.constant 0 : index
    %62 = vector.load %arg6[%c0_40, %c0_41, %c0_42] : memref<6x8x128xf32, #tpu.memory_space<vmem>>, vector<1x8x128xf32>
    %63 = vector.shape_cast %62 : vector<1x8x128xf32> to vector<8x128xf32>
    %64 = vector.shape_cast %61 : vector<8x128xf32> to vector<1x8x128xf32>
    tpu.vector_store %arg6[%c0_40, %c0_41, %c0_42], %64 {strides = array<i32>} : memref<6x8x128xf32, #tpu.memory_space<vmem>>, vector<1x8x128xf32>,
    %c1_43 = arith.constant 1 : index
    %c0_44 = arith.constant 0 : index
    %c0_45 = arith.constant 0 : index
    %65 = vector.load %arg6[%c1_43, %c0_44, %c0_45] : memref<6x8x128xf32, #tpu.memory_space<vmem>>, vector<1x8x128xf32>
    %66 = vector.shape_cast %65 : vector<1x8x128xf32> to vector<8x128xf32>
    %67 = vector.shape_cast %51 : vector<8x128xf32> to vector<1x8x128xf32>
    %cst_46 = arith.constant dense<0.000000e+00> : vector<8x128xf32>
    %68 = vector.multi_reduction <add>, %67, %cst_46 [0] : vector<1x8x128xf32> to vector<8x128xf32>
    %69 = arith.addf %66, %68 : vector<8x128xf32>
    %c1_47 = arith.constant 1 : index
    %c0_48 = arith.constant 0 : index
    %c0_49 = arith.constant 0 : index
    %70 = vector.load %arg6[%c1_47, %c0_48, %c0_49] : memref<6x8x128xf32, #tpu.memory_space<vmem>>, vector<1x8x128xf32>
    %71 = vector.shape_cast %70 : vector<1x8x128xf32> to vector<8x128xf32>
    %72 = vector.shape_cast %69 : vector<8x128xf32> to vector<1x8x128xf32>
    tpu.vector_store %arg6[%c1_47, %c0_48, %c0_49], %72 {strides = array<i32>} : memref<6x8x128xf32, #tpu.memory_space<vmem>>, vector<1x8x128xf32>,
    %c2_50 = arith.constant 2 : index
    %c0_51 = arith.constant 0 : index
    %c0_52 = arith.constant 0 : index
    %73 = vector.load %arg6[%c2_50, %c0_51, %c0_52] : memref<6x8x128xf32, #tpu.memory_space<vmem>>, vector<1x8x128xf32>
    %74 = vector.shape_cast %73 : vector<1x8x128xf32> to vector<8x128xf32>
    %75 = vector.shape_cast %53 : vector<8x128xf32> to vector<1x8x128xf32>
    %cst_53 = arith.constant dense<0.000000e+00> : vector<8x128xf32>
    %76 = vector.multi_reduction <add>, %75, %cst_53 [0] : vector<1x8x128xf32> to vector<8x128xf32>
    %77 = arith.addf %74, %76 : vector<8x128xf32>
    %c2_54 = arith.constant 2 : index
    %c0_55 = arith.constant 0 : index
    %c0_56 = arith.constant 0 : index
    %78 = vector.load %arg6[%c2_54, %c0_55, %c0_56] : memref<6x8x128xf32, #tpu.memory_space<vmem>>, vector<1x8x128xf32>
    %79 = vector.shape_cast %78 : vector<1x8x128xf32> to vector<8x128xf32>
    %80 = vector.shape_cast %77 : vector<8x128xf32> to vector<1x8x128xf32>
    tpu.vector_store %arg6[%c2_54, %c0_55, %c0_56], %80 {strides = array<i32>} : memref<6x8x128xf32, #tpu.memory_space<vmem>>, vector<1x8x128xf32>,
    %c3_57 = arith.constant 3 : index
    %c0_58 = arith.constant 0 : index
    %c0_59 = arith.constant 0 : index
    %81 = vector.load %arg6[%c3_57, %c0_58, %c0_59] : memref<6x8x128xf32, #tpu.memory_space<vmem>>, vector<1x8x128xf32>
    %82 = vector.shape_cast %81 : vector<1x8x128xf32> to vector<8x128xf32>
    %83 = vector.shape_cast %54 : vector<8x128xf32> to vector<1x8x128xf32>
    %cst_60 = arith.constant dense<0.000000e+00> : vector<8x128xf32>
    %84 = vector.multi_reduction <add>, %83, %cst_60 [0] : vector<1x8x128xf32> to vector<8x128xf32>
    %85 = arith.addf %82, %84 : vector<8x128xf32>
    %c3_61 = arith.constant 3 : index
    %c0_62 = arith.constant 0 : index
    %c0_63 = arith.constant 0 : index
    %86 = vector.load %arg6[%c3_61, %c0_62, %c0_63] : memref<6x8x128xf32, #tpu.memory_space<vmem>>, vector<1x8x128xf32>
    %87 = vector.shape_cast %86 : vector<1x8x128xf32> to vector<8x128xf32>
    %88 = vector.shape_cast %85 : vector<8x128xf32> to vector<1x8x128xf32>
    tpu.vector_store %arg6[%c3_61, %c0_62, %c0_63], %88 {strides = array<i32>} : memref<6x8x128xf32, #tpu.memory_space<vmem>>, vector<1x8x128xf32>,
    %c4_64 = arith.constant 4 : index
    %c0_65 = arith.constant 0 : index
    %c0_66 = arith.constant 0 : index
    %89 = vector.load %arg6[%c4_64, %c0_65, %c0_66] : memref<6x8x128xf32, #tpu.memory_space<vmem>>, vector<1x8x128xf32>
    %90 = vector.shape_cast %89 : vector<1x8x128xf32> to vector<8x128xf32>
    %91 = vector.shape_cast %55 : vector<8x128xf32> to vector<1x8x128xf32>
    %cst_67 = arith.constant dense<0.000000e+00> : vector<8x128xf32>
    %92 = vector.multi_reduction <add>, %91, %cst_67 [0] : vector<1x8x128xf32> to vector<8x128xf32>
    %93 = arith.addf %90, %92 : vector<8x128xf32>
    %c4_68 = arith.constant 4 : index
    %c0_69 = arith.constant 0 : index
    %c0_70 = arith.constant 0 : index
    %94 = vector.load %arg6[%c4_68, %c0_69, %c0_70] : memref<6x8x128xf32, #tpu.memory_space<vmem>>, vector<1x8x128xf32>
    %95 = vector.shape_cast %94 : vector<1x8x128xf32> to vector<8x128xf32>
    %96 = vector.shape_cast %93 : vector<8x128xf32> to vector<1x8x128xf32>
    tpu.vector_store %arg6[%c4_68, %c0_69, %c0_70], %96 {strides = array<i32>} : memref<6x8x128xf32, #tpu.memory_space<vmem>>, vector<1x8x128xf32>,
    %c5_71 = arith.constant 5 : index
    %c0_72 = arith.constant 0 : index
    %c0_73 = arith.constant 0 : index
    %97 = vector.load %arg6[%c5_71, %c0_72, %c0_73] : memref<6x8x128xf32, #tpu.memory_space<vmem>>, vector<1x8x128xf32>
    %98 = vector.shape_cast %97 : vector<1x8x128xf32> to vector<8x128xf32>
    %99 = vector.shape_cast %56 : vector<8x128xf32> to vector<1x8x128xf32>
    %cst_74 = arith.constant dense<0.000000e+00> : vector<8x128xf32>
    %100 = vector.multi_reduction <add>, %99, %cst_74 [0] : vector<1x8x128xf32> to vector<8x128xf32>
    %101 = arith.addf %98, %100 : vector<8x128xf32>
    %c5_75 = arith.constant 5 : index
    %c0_76 = arith.constant 0 : index
    %c0_77 = arith.constant 0 : index
    %102 = vector.load %arg6[%c5_75, %c0_76, %c0_77] : memref<6x8x128xf32, #tpu.memory_space<vmem>>, vector<1x8x128xf32>
    %103 = vector.shape_cast %102 : vector<1x8x128xf32> to vector<8x128xf32>
    %104 = vector.shape_cast %101 : vector<8x128xf32> to vector<1x8x128xf32>
    tpu.vector_store %arg6[%c5_75, %c0_76, %c0_77], %104 {strides = array<i32>} : memref<6x8x128xf32, #tpu.memory_space<vmem>>, vector<1x8x128xf32>,
    %c0_i32_78 = arith.constant 0 : i32
    %105 = arith.cmpi eq, %arg1, %c0_i32_78 : i32
    %106 = arith.extui %105 : i1 to i32
    %c0_i32_79 = arith.constant 0 : i32
    %107 = arith.cmpi ne, %106, %c0_i32_79 : i32
    scf.if %107 {
      %c0_80 = arith.constant 0 : index
      %c0_81 = arith.constant 0 : index
      %c0_82 = arith.constant 0 : index
      %108 = vector.load %arg6[%c0_80, %c0_81, %c0_82] : memref<6x8x128xf32, #tpu.memory_space<vmem>>, vector<6x8x128xf32>
      %c0_83 = arith.constant 0 : index
      %c0_84 = arith.constant 0 : index
      %c0_85 = arith.constant 0 : index
      %c0_86 = arith.constant 0 : index
      %109 = vector.load %arg5[%c0_83, %c0_84, %c0_85, %c0_86] : memref<1x6x8x128xf32, #tpu.memory_space<vmem>>, vector<1x6x8x128xf32>
      %110 = vector.shape_cast %109 : vector<1x6x8x128xf32> to vector<6x8x128xf32>
      %111 = vector.shape_cast %108 : vector<6x8x128xf32> to vector<1x6x8x128xf32>
      tpu.vector_store %arg5[%c0_83, %c0_84, %c0_85, %c0_86], %111 {strides = array<i32>} : memref<1x6x8x128xf32, #tpu.memory_space<vmem>>, vector<1x6x8x128xf32>,
    } else {
    }
    return
  }
  func.func @transform_0(%arg0: i32, %arg1: i32) -> (i32, i32, i32, i32) {
    %c0_i32 = arith.constant 0 : i32
    %c0_i32_0 = arith.constant 0 : i32
    %c0_i32_1 = arith.constant 0 : i32
    return %arg0, %c0_i32, %arg1, %c0_i32_0 : i32, i32, i32, i32
  }
  func.func @transform_1(%arg0: i32, %arg1: i32) -> (i32, i32, i32, i32) {
    %c0_i32 = arith.constant 0 : i32
    %c0_i32_0 = arith.constant 0 : i32
    %c0_i32_1 = arith.constant 0 : i32
    return %arg0, %c0_i32, %arg1, %c0_i32_0 : i32, i32, i32, i32
  }
  func.func @transform_2(%arg0: i32, %arg1: i32) -> i32 {
    %c0_i32 = arith.constant 0 : i32
    %c0_i32_0 = arith.constant 0 : i32
    return %c0_i32 : i32
  }
  func.func @transform_3(%arg0: i32, %arg1: i32) -> (i32, i32, i32, i32) {
    %c0_i32 = arith.constant 0 : i32
    %c0_i32_0 = arith.constant 0 : i32
    %c0_i32_1 = arith.constant 0 : i32
    %c0_i32_2 = arith.constant 0 : i32
    return %arg0, %c0_i32, %c0_i32_0, %c0_i32_1 : i32, i32, i32, i32
  }
}

module attributes {stable_mosaic.version = 11 : i64} {
  func.func @_stats_kernel(%arg0: i32, %arg1: i32, %arg2: memref<1x1x8x128xf32, #tpu.memory_space<vmem>>, %arg3: memref<1x1x8x128xf32, #tpu.memory_space<vmem>>, %arg4: memref<1xf32, #tpu.memory_space<smem>>, %arg5: memref<1x6x8x128xf32, #tpu.memory_space<vmem>>, %arg6: memref<6x8x128xf32, #tpu.memory_space<vmem>>) attributes {dimension_semantics = [#tpu.dimension_semantics<parallel>, #tpu.dimension_semantics<arbitrary>], iteration_bounds = array<i64: 2, 1>, scalar_prefetch = 0 : i64, scratch_operands = 1 : i64, tpu.core_type = #tpu.core_type<tc>, window_params = [{transform_indices = @transform_0, window_bounds = array<i64: 1, 1, 8, 128>}, {transform_indices = @transform_1, window_bounds = array<i64: 1, 1, 8, 128>}, {transform_indices = @transform_2, window_bounds = array<i64: 1>}, {transform_indices = @transform_3, window_bounds = array<i64: 1, 6, 8, 128>}]} {
    %c0_i32 = arith.constant 0 : i32
    %0 = arith.cmpi eq, %arg1, %c0_i32 : i32
    %1 = arith.extui %0 : i1 to i32
    %c0_i32_0 = arith.constant 0 : i32
    %2 = arith.cmpi ne, %1, %c0_i32_0 : i32
    scf.if %2 {
      %cst_47 = arith.constant 0.000000e+00 : f32
      %66 = vector.broadcast %cst_47 : f32 to vector<6x8x128xf32>
      %c0_48 = arith.constant 0 : index
      %c0_49 = arith.constant 0 : index
      %c0_50 = arith.constant 0 : index
      %67 = vector.load %arg6[%c0_48, %c0_49, %c0_50] : memref<6x8x128xf32, #tpu.memory_space<vmem>>, vector<6x8x128xf32>
      tpu.vector_store %arg6[%c0_48, %c0_49, %c0_50], %66 {strides = array<i32>} : memref<6x8x128xf32, #tpu.memory_space<vmem>>, vector<6x8x128xf32>,
    } else {
    }
    %c0 = arith.constant 0 : index
    %3 = memref.load %arg4[%c0] : memref<1xf32, #tpu.memory_space<smem>>
    %c0_1 = arith.constant 0 : index
    %c0_2 = arith.constant 0 : index
    %c0_3 = arith.constant 0 : index
    %c0_4 = arith.constant 0 : index
    %4 = vector.load %arg2[%c0_1, %c0_2, %c0_3, %c0_4] : memref<1x1x8x128xf32, #tpu.memory_space<vmem>>, vector<1x1x8x128xf32>
    %5 = vector.shape_cast %4 : vector<1x1x8x128xf32> to vector<8x128xf32>
    %6 = vector.broadcast %3 : f32 to vector<8x128xf32>
    %7 = arith.mulf %6, %5 : vector<8x128xf32>
    %c0_5 = arith.constant 0 : index
    %c0_6 = arith.constant 0 : index
    %c0_7 = arith.constant 0 : index
    %c0_8 = arith.constant 0 : index
    %8 = vector.load %arg3[%c0_5, %c0_6, %c0_7, %c0_8] : memref<1x1x8x128xf32, #tpu.memory_space<vmem>>, vector<1x1x8x128xf32>
    %9 = vector.shape_cast %8 : vector<1x1x8x128xf32> to vector<8x128xf32>
    %10 = arith.subf %7, %9 : vector<8x128xf32>
    %11 = arith.mulf %7, %7 : vector<8x128xf32>
    %12 = arith.mulf %9, %9 : vector<8x128xf32>
    %13 = arith.mulf %7, %9 : vector<8x128xf32>
    %14 = arith.mulf %10, %10 : vector<8x128xf32>
    %c0_9 = arith.constant 0 : index
    %c0_10 = arith.constant 0 : index
    %c0_11 = arith.constant 0 : index
    %15 = vector.load %arg6[%c0_9, %c0_10, %c0_11] : memref<6x8x128xf32, #tpu.memory_space<vmem>>, vector<1x8x128xf32>
    %16 = vector.shape_cast %15 : vector<1x8x128xf32> to vector<8x128xf32>
    %17 = vector.shape_cast %7 : vector<8x128xf32> to vector<1x8x128xf32>
    %cst = arith.constant dense<0.000000e+00> : vector<8x128xf32>
    %18 = vector.multi_reduction <add>, %17, %cst [0] : vector<1x8x128xf32> to vector<8x128xf32>
    %19 = arith.addf %16, %18 : vector<8x128xf32>
    %c0_12 = arith.constant 0 : index
    %c0_13 = arith.constant 0 : index
    %c0_14 = arith.constant 0 : index
    %20 = vector.load %arg6[%c0_12, %c0_13, %c0_14] : memref<6x8x128xf32, #tpu.memory_space<vmem>>, vector<1x8x128xf32>
    %21 = vector.shape_cast %20 : vector<1x8x128xf32> to vector<8x128xf32>
    %22 = vector.shape_cast %19 : vector<8x128xf32> to vector<1x8x128xf32>
    tpu.vector_store %arg6[%c0_12, %c0_13, %c0_14], %22 {strides = array<i32>} : memref<6x8x128xf32, #tpu.memory_space<vmem>>, vector<1x8x128xf32>,
    %c1 = arith.constant 1 : index
    %c0_15 = arith.constant 0 : index
    %c0_16 = arith.constant 0 : index
    %23 = vector.load %arg6[%c1, %c0_15, %c0_16] : memref<6x8x128xf32, #tpu.memory_space<vmem>>, vector<1x8x128xf32>
    %24 = vector.shape_cast %23 : vector<1x8x128xf32> to vector<8x128xf32>
    %25 = vector.shape_cast %9 : vector<8x128xf32> to vector<1x8x128xf32>
    %cst_17 = arith.constant dense<0.000000e+00> : vector<8x128xf32>
    %26 = vector.multi_reduction <add>, %25, %cst_17 [0] : vector<1x8x128xf32> to vector<8x128xf32>
    %27 = arith.addf %24, %26 : vector<8x128xf32>
    %c1_18 = arith.constant 1 : index
    %c0_19 = arith.constant 0 : index
    %c0_20 = arith.constant 0 : index
    %28 = vector.load %arg6[%c1_18, %c0_19, %c0_20] : memref<6x8x128xf32, #tpu.memory_space<vmem>>, vector<1x8x128xf32>
    %29 = vector.shape_cast %28 : vector<1x8x128xf32> to vector<8x128xf32>
    %30 = vector.shape_cast %27 : vector<8x128xf32> to vector<1x8x128xf32>
    tpu.vector_store %arg6[%c1_18, %c0_19, %c0_20], %30 {strides = array<i32>} : memref<6x8x128xf32, #tpu.memory_space<vmem>>, vector<1x8x128xf32>,
    %c2 = arith.constant 2 : index
    %c0_21 = arith.constant 0 : index
    %c0_22 = arith.constant 0 : index
    %31 = vector.load %arg6[%c2, %c0_21, %c0_22] : memref<6x8x128xf32, #tpu.memory_space<vmem>>, vector<1x8x128xf32>
    %32 = vector.shape_cast %31 : vector<1x8x128xf32> to vector<8x128xf32>
    %33 = vector.shape_cast %11 : vector<8x128xf32> to vector<1x8x128xf32>
    %cst_23 = arith.constant dense<0.000000e+00> : vector<8x128xf32>
    %34 = vector.multi_reduction <add>, %33, %cst_23 [0] : vector<1x8x128xf32> to vector<8x128xf32>
    %35 = arith.addf %32, %34 : vector<8x128xf32>
    %c2_24 = arith.constant 2 : index
    %c0_25 = arith.constant 0 : index
    %c0_26 = arith.constant 0 : index
    %36 = vector.load %arg6[%c2_24, %c0_25, %c0_26] : memref<6x8x128xf32, #tpu.memory_space<vmem>>, vector<1x8x128xf32>
    %37 = vector.shape_cast %36 : vector<1x8x128xf32> to vector<8x128xf32>
    %38 = vector.shape_cast %35 : vector<8x128xf32> to vector<1x8x128xf32>
    tpu.vector_store %arg6[%c2_24, %c0_25, %c0_26], %38 {strides = array<i32>} : memref<6x8x128xf32, #tpu.memory_space<vmem>>, vector<1x8x128xf32>,
    %c3 = arith.constant 3 : index
    %c0_27 = arith.constant 0 : index
    %c0_28 = arith.constant 0 : index
    %39 = vector.load %arg6[%c3, %c0_27, %c0_28] : memref<6x8x128xf32, #tpu.memory_space<vmem>>, vector<1x8x128xf32>
    %40 = vector.shape_cast %39 : vector<1x8x128xf32> to vector<8x128xf32>
    %41 = vector.shape_cast %12 : vector<8x128xf32> to vector<1x8x128xf32>
    %cst_29 = arith.constant dense<0.000000e+00> : vector<8x128xf32>
    %42 = vector.multi_reduction <add>, %41, %cst_29 [0] : vector<1x8x128xf32> to vector<8x128xf32>
    %43 = arith.addf %40, %42 : vector<8x128xf32>
    %c3_30 = arith.constant 3 : index
    %c0_31 = arith.constant 0 : index
    %c0_32 = arith.constant 0 : index
    %44 = vector.load %arg6[%c3_30, %c0_31, %c0_32] : memref<6x8x128xf32, #tpu.memory_space<vmem>>, vector<1x8x128xf32>
    %45 = vector.shape_cast %44 : vector<1x8x128xf32> to vector<8x128xf32>
    %46 = vector.shape_cast %43 : vector<8x128xf32> to vector<1x8x128xf32>
    tpu.vector_store %arg6[%c3_30, %c0_31, %c0_32], %46 {strides = array<i32>} : memref<6x8x128xf32, #tpu.memory_space<vmem>>, vector<1x8x128xf32>,
    %c4 = arith.constant 4 : index
    %c0_33 = arith.constant 0 : index
    %c0_34 = arith.constant 0 : index
    %47 = vector.load %arg6[%c4, %c0_33, %c0_34] : memref<6x8x128xf32, #tpu.memory_space<vmem>>, vector<1x8x128xf32>
    %48 = vector.shape_cast %47 : vector<1x8x128xf32> to vector<8x128xf32>
    %49 = vector.shape_cast %13 : vector<8x128xf32> to vector<1x8x128xf32>
    %cst_35 = arith.constant dense<0.000000e+00> : vector<8x128xf32>
    %50 = vector.multi_reduction <add>, %49, %cst_35 [0] : vector<1x8x128xf32> to vector<8x128xf32>
    %51 = arith.addf %48, %50 : vector<8x128xf32>
    %c4_36 = arith.constant 4 : index
    %c0_37 = arith.constant 0 : index
    %c0_38 = arith.constant 0 : index
    %52 = vector.load %arg6[%c4_36, %c0_37, %c0_38] : memref<6x8x128xf32, #tpu.memory_space<vmem>>, vector<1x8x128xf32>
    %53 = vector.shape_cast %52 : vector<1x8x128xf32> to vector<8x128xf32>
    %54 = vector.shape_cast %51 : vector<8x128xf32> to vector<1x8x128xf32>
    tpu.vector_store %arg6[%c4_36, %c0_37, %c0_38], %54 {strides = array<i32>} : memref<6x8x128xf32, #tpu.memory_space<vmem>>, vector<1x8x128xf32>,
    %c5 = arith.constant 5 : index
    %c0_39 = arith.constant 0 : index
    %c0_40 = arith.constant 0 : index
    %55 = vector.load %arg6[%c5, %c0_39, %c0_40] : memref<6x8x128xf32, #tpu.memory_space<vmem>>, vector<1x8x128xf32>
    %56 = vector.shape_cast %55 : vector<1x8x128xf32> to vector<8x128xf32>
    %57 = vector.shape_cast %14 : vector<8x128xf32> to vector<1x8x128xf32>
    %cst_41 = arith.constant dense<0.000000e+00> : vector<8x128xf32>
    %58 = vector.multi_reduction <add>, %57, %cst_41 [0] : vector<1x8x128xf32> to vector<8x128xf32>
    %59 = arith.addf %56, %58 : vector<8x128xf32>
    %c5_42 = arith.constant 5 : index
    %c0_43 = arith.constant 0 : index
    %c0_44 = arith.constant 0 : index
    %60 = vector.load %arg6[%c5_42, %c0_43, %c0_44] : memref<6x8x128xf32, #tpu.memory_space<vmem>>, vector<1x8x128xf32>
    %61 = vector.shape_cast %60 : vector<1x8x128xf32> to vector<8x128xf32>
    %62 = vector.shape_cast %59 : vector<8x128xf32> to vector<1x8x128xf32>
    tpu.vector_store %arg6[%c5_42, %c0_43, %c0_44], %62 {strides = array<i32>} : memref<6x8x128xf32, #tpu.memory_space<vmem>>, vector<1x8x128xf32>,
    %c0_i32_45 = arith.constant 0 : i32
    %63 = arith.cmpi eq, %arg1, %c0_i32_45 : i32
    %64 = arith.extui %63 : i1 to i32
    %c0_i32_46 = arith.constant 0 : i32
    %65 = arith.cmpi ne, %64, %c0_i32_46 : i32
    scf.if %65 {
      %c0_47 = arith.constant 0 : index
      %c0_48 = arith.constant 0 : index
      %c0_49 = arith.constant 0 : index
      %66 = vector.load %arg6[%c0_47, %c0_48, %c0_49] : memref<6x8x128xf32, #tpu.memory_space<vmem>>, vector<6x8x128xf32>
      %c0_50 = arith.constant 0 : index
      %c0_51 = arith.constant 0 : index
      %c0_52 = arith.constant 0 : index
      %c0_53 = arith.constant 0 : index
      %67 = vector.load %arg5[%c0_50, %c0_51, %c0_52, %c0_53] : memref<1x6x8x128xf32, #tpu.memory_space<vmem>>, vector<1x6x8x128xf32>
      %68 = vector.shape_cast %67 : vector<1x6x8x128xf32> to vector<6x8x128xf32>
      %69 = vector.shape_cast %66 : vector<6x8x128xf32> to vector<1x6x8x128xf32>
      tpu.vector_store %arg5[%c0_50, %c0_51, %c0_52, %c0_53], %69 {strides = array<i32>} : memref<1x6x8x128xf32, #tpu.memory_space<vmem>>, vector<1x6x8x128xf32>,
    } else {
    }
    return
  }
  func.func @transform_0(%arg0: i32, %arg1: i32) -> (i32, i32, i32, i32) {
    %c0_i32 = arith.constant 0 : i32
    %c0_i32_0 = arith.constant 0 : i32
    %c0_i32_1 = arith.constant 0 : i32
    return %arg0, %c0_i32, %arg1, %c0_i32_0 : i32, i32, i32, i32
  }
  func.func @transform_1(%arg0: i32, %arg1: i32) -> (i32, i32, i32, i32) {
    %c0_i32 = arith.constant 0 : i32
    %c0_i32_0 = arith.constant 0 : i32
    %c0_i32_1 = arith.constant 0 : i32
    return %arg0, %c0_i32, %arg1, %c0_i32_0 : i32, i32, i32, i32
  }
  func.func @transform_2(%arg0: i32, %arg1: i32) -> i32 {
    %c0_i32 = arith.constant 0 : i32
    %c0_i32_0 = arith.constant 0 : i32
    return %c0_i32 : i32
  }
  func.func @transform_3(%arg0: i32, %arg1: i32) -> (i32, i32, i32, i32) {
    %c0_i32 = arith.constant 0 : i32
    %c0_i32_0 = arith.constant 0 : i32
    %c0_i32_1 = arith.constant 0 : i32
    %c0_i32_2 = arith.constant 0 : i32
    return %arg0, %c0_i32, %c0_i32_0, %c0_i32_1 : i32, i32, i32, i32
  }
}

module attributes {stable_mosaic.version = 11 : i64} {
  func.func @_stats_kernel(%arg0: i32, %arg1: i32, %arg2: memref<1x4x8x128xf32, #tpu.memory_space<vmem>>, %arg3: memref<1x1x8x128xf32, #tpu.memory_space<vmem>>, %arg4: memref<4xf32, #tpu.memory_space<smem>>, %arg5: memref<1x6x8x128xf32, #tpu.memory_space<vmem>>, %arg6: memref<6x8x128xf32, #tpu.memory_space<vmem>>) attributes {dimension_semantics = [#tpu.dimension_semantics<parallel>, #tpu.dimension_semantics<arbitrary>], iteration_bounds = array<i64: 2, 1>, scalar_prefetch = 0 : i64, scratch_operands = 1 : i64, tpu.core_type = #tpu.core_type<tc>, window_params = [{transform_indices = @transform_0, window_bounds = array<i64: 1, 4, 8, 128>}, {transform_indices = @transform_1, window_bounds = array<i64: 1, 1, 8, 128>}, {transform_indices = @transform_2, window_bounds = array<i64: 4>}, {transform_indices = @transform_3, window_bounds = array<i64: 1, 6, 8, 128>}]} {
    %c0_i32 = arith.constant 0 : i32
    %0 = arith.cmpi eq, %arg1, %c0_i32 : i32
    %1 = arith.extui %0 : i1 to i32
    %c0_i32_0 = arith.constant 0 : i32
    %2 = arith.cmpi ne, %1, %c0_i32_0 : i32
    scf.if %2 {
      %cst_62 = arith.constant 0.000000e+00 : f32
      %84 = vector.broadcast %cst_62 : f32 to vector<6x8x128xf32>
      %c0_63 = arith.constant 0 : index
      %c0_64 = arith.constant 0 : index
      %c0_65 = arith.constant 0 : index
      %85 = vector.load %arg6[%c0_63, %c0_64, %c0_65] : memref<6x8x128xf32, #tpu.memory_space<vmem>>, vector<6x8x128xf32>
      tpu.vector_store %arg6[%c0_63, %c0_64, %c0_65], %84 {strides = array<i32>} : memref<6x8x128xf32, #tpu.memory_space<vmem>>, vector<6x8x128xf32>,
    } else {
    }
    %c0 = arith.constant 0 : index
    %3 = memref.load %arg4[%c0] : memref<4xf32, #tpu.memory_space<smem>>
    %c0_1 = arith.constant 0 : index
    %c0_2 = arith.constant 0 : index
    %c0_3 = arith.constant 0 : index
    %c0_4 = arith.constant 0 : index
    %4 = vector.load %arg2[%c0_1, %c0_2, %c0_3, %c0_4] : memref<1x4x8x128xf32, #tpu.memory_space<vmem>>, vector<1x1x8x128xf32>
    %5 = vector.shape_cast %4 : vector<1x1x8x128xf32> to vector<8x128xf32>
    %6 = vector.broadcast %3 : f32 to vector<8x128xf32>
    %7 = arith.mulf %6, %5 : vector<8x128xf32>
    %c1 = arith.constant 1 : index
    %8 = memref.load %arg4[%c1] : memref<4xf32, #tpu.memory_space<smem>>
    %c0_5 = arith.constant 0 : index
    %c1_6 = arith.constant 1 : index
    %c0_7 = arith.constant 0 : index
    %c0_8 = arith.constant 0 : index
    %9 = vector.load %arg2[%c0_5, %c1_6, %c0_7, %c0_8] : memref<1x4x8x128xf32, #tpu.memory_space<vmem>>, vector<1x1x8x128xf32>
    %10 = vector.shape_cast %9 : vector<1x1x8x128xf32> to vector<8x128xf32>
    %11 = vector.broadcast %8 : f32 to vector<8x128xf32>
    %12 = arith.mulf %11, %10 : vector<8x128xf32>
    %13 = arith.addf %7, %12 : vector<8x128xf32>
    %c2 = arith.constant 2 : index
    %14 = memref.load %arg4[%c2] : memref<4xf32, #tpu.memory_space<smem>>
    %c0_9 = arith.constant 0 : index
    %c2_10 = arith.constant 2 : index
    %c0_11 = arith.constant 0 : index
    %c0_12 = arith.constant 0 : index
    %15 = vector.load %arg2[%c0_9, %c2_10, %c0_11, %c0_12] : memref<1x4x8x128xf32, #tpu.memory_space<vmem>>, vector<1x1x8x128xf32>
    %16 = vector.shape_cast %15 : vector<1x1x8x128xf32> to vector<8x128xf32>
    %17 = vector.broadcast %14 : f32 to vector<8x128xf32>
    %18 = arith.mulf %17, %16 : vector<8x128xf32>
    %19 = arith.addf %13, %18 : vector<8x128xf32>
    %c3 = arith.constant 3 : index
    %20 = memref.load %arg4[%c3] : memref<4xf32, #tpu.memory_space<smem>>
    %c0_13 = arith.constant 0 : index
    %c3_14 = arith.constant 3 : index
    %c0_15 = arith.constant 0 : index
    %c0_16 = arith.constant 0 : index
    %21 = vector.load %arg2[%c0_13, %c3_14, %c0_15, %c0_16] : memref<1x4x8x128xf32, #tpu.memory_space<vmem>>, vector<1x1x8x128xf32>
    %22 = vector.shape_cast %21 : vector<1x1x8x128xf32> to vector<8x128xf32>
    %23 = vector.broadcast %20 : f32 to vector<8x128xf32>
    %24 = arith.mulf %23, %22 : vector<8x128xf32>
    %25 = arith.addf %19, %24 : vector<8x128xf32>
    %c0_17 = arith.constant 0 : index
    %c0_18 = arith.constant 0 : index
    %c0_19 = arith.constant 0 : index
    %c0_20 = arith.constant 0 : index
    %26 = vector.load %arg3[%c0_17, %c0_18, %c0_19, %c0_20] : memref<1x1x8x128xf32, #tpu.memory_space<vmem>>, vector<1x1x8x128xf32>
    %27 = vector.shape_cast %26 : vector<1x1x8x128xf32> to vector<8x128xf32>
    %28 = arith.subf %25, %27 : vector<8x128xf32>
    %29 = arith.mulf %25, %25 : vector<8x128xf32>
    %30 = arith.mulf %27, %27 : vector<8x128xf32>
    %31 = arith.mulf %25, %27 : vector<8x128xf32>
    %32 = arith.mulf %28, %28 : vector<8x128xf32>
    %c0_21 = arith.constant 0 : index
    %c0_22 = arith.constant 0 : index
    %c0_23 = arith.constant 0 : index
    %33 = vector.load %arg6[%c0_21, %c0_22, %c0_23] : memref<6x8x128xf32, #tpu.memory_space<vmem>>, vector<1x8x128xf32>
    %34 = vector.shape_cast %33 : vector<1x8x128xf32> to vector<8x128xf32>
    %35 = vector.shape_cast %25 : vector<8x128xf32> to vector<1x8x128xf32>
    %cst = arith.constant dense<0.000000e+00> : vector<8x128xf32>
    %36 = vector.multi_reduction <add>, %35, %cst [0] : vector<1x8x128xf32> to vector<8x128xf32>
    %37 = arith.addf %34, %36 : vector<8x128xf32>
    %c0_24 = arith.constant 0 : index
    %c0_25 = arith.constant 0 : index
    %c0_26 = arith.constant 0 : index
    %38 = vector.load %arg6[%c0_24, %c0_25, %c0_26] : memref<6x8x128xf32, #tpu.memory_space<vmem>>, vector<1x8x128xf32>
    %39 = vector.shape_cast %38 : vector<1x8x128xf32> to vector<8x128xf32>
    %40 = vector.shape_cast %37 : vector<8x128xf32> to vector<1x8x128xf32>
    tpu.vector_store %arg6[%c0_24, %c0_25, %c0_26], %40 {strides = array<i32>} : memref<6x8x128xf32, #tpu.memory_space<vmem>>, vector<1x8x128xf32>,
    %c1_27 = arith.constant 1 : index
    %c0_28 = arith.constant 0 : index
    %c0_29 = arith.constant 0 : index
    %41 = vector.load %arg6[%c1_27, %c0_28, %c0_29] : memref<6x8x128xf32, #tpu.memory_space<vmem>>, vector<1x8x128xf32>
    %42 = vector.shape_cast %41 : vector<1x8x128xf32> to vector<8x128xf32>
    %43 = vector.shape_cast %27 : vector<8x128xf32> to vector<1x8x128xf32>
    %cst_30 = arith.constant dense<0.000000e+00> : vector<8x128xf32>
    %44 = vector.multi_reduction <add>, %43, %cst_30 [0] : vector<1x8x128xf32> to vector<8x128xf32>
    %45 = arith.addf %42, %44 : vector<8x128xf32>
    %c1_31 = arith.constant 1 : index
    %c0_32 = arith.constant 0 : index
    %c0_33 = arith.constant 0 : index
    %46 = vector.load %arg6[%c1_31, %c0_32, %c0_33] : memref<6x8x128xf32, #tpu.memory_space<vmem>>, vector<1x8x128xf32>
    %47 = vector.shape_cast %46 : vector<1x8x128xf32> to vector<8x128xf32>
    %48 = vector.shape_cast %45 : vector<8x128xf32> to vector<1x8x128xf32>
    tpu.vector_store %arg6[%c1_31, %c0_32, %c0_33], %48 {strides = array<i32>} : memref<6x8x128xf32, #tpu.memory_space<vmem>>, vector<1x8x128xf32>,
    %c2_34 = arith.constant 2 : index
    %c0_35 = arith.constant 0 : index
    %c0_36 = arith.constant 0 : index
    %49 = vector.load %arg6[%c2_34, %c0_35, %c0_36] : memref<6x8x128xf32, #tpu.memory_space<vmem>>, vector<1x8x128xf32>
    %50 = vector.shape_cast %49 : vector<1x8x128xf32> to vector<8x128xf32>
    %51 = vector.shape_cast %29 : vector<8x128xf32> to vector<1x8x128xf32>
    %cst_37 = arith.constant dense<0.000000e+00> : vector<8x128xf32>
    %52 = vector.multi_reduction <add>, %51, %cst_37 [0] : vector<1x8x128xf32> to vector<8x128xf32>
    %53 = arith.addf %50, %52 : vector<8x128xf32>
    %c2_38 = arith.constant 2 : index
    %c0_39 = arith.constant 0 : index
    %c0_40 = arith.constant 0 : index
    %54 = vector.load %arg6[%c2_38, %c0_39, %c0_40] : memref<6x8x128xf32, #tpu.memory_space<vmem>>, vector<1x8x128xf32>
    %55 = vector.shape_cast %54 : vector<1x8x128xf32> to vector<8x128xf32>
    %56 = vector.shape_cast %53 : vector<8x128xf32> to vector<1x8x128xf32>
    tpu.vector_store %arg6[%c2_38, %c0_39, %c0_40], %56 {strides = array<i32>} : memref<6x8x128xf32, #tpu.memory_space<vmem>>, vector<1x8x128xf32>,
    %c3_41 = arith.constant 3 : index
    %c0_42 = arith.constant 0 : index
    %c0_43 = arith.constant 0 : index
    %57 = vector.load %arg6[%c3_41, %c0_42, %c0_43] : memref<6x8x128xf32, #tpu.memory_space<vmem>>, vector<1x8x128xf32>
    %58 = vector.shape_cast %57 : vector<1x8x128xf32> to vector<8x128xf32>
    %59 = vector.shape_cast %30 : vector<8x128xf32> to vector<1x8x128xf32>
    %cst_44 = arith.constant dense<0.000000e+00> : vector<8x128xf32>
    %60 = vector.multi_reduction <add>, %59, %cst_44 [0] : vector<1x8x128xf32> to vector<8x128xf32>
    %61 = arith.addf %58, %60 : vector<8x128xf32>
    %c3_45 = arith.constant 3 : index
    %c0_46 = arith.constant 0 : index
    %c0_47 = arith.constant 0 : index
    %62 = vector.load %arg6[%c3_45, %c0_46, %c0_47] : memref<6x8x128xf32, #tpu.memory_space<vmem>>, vector<1x8x128xf32>
    %63 = vector.shape_cast %62 : vector<1x8x128xf32> to vector<8x128xf32>
    %64 = vector.shape_cast %61 : vector<8x128xf32> to vector<1x8x128xf32>
    tpu.vector_store %arg6[%c3_45, %c0_46, %c0_47], %64 {strides = array<i32>} : memref<6x8x128xf32, #tpu.memory_space<vmem>>, vector<1x8x128xf32>,
    %c4 = arith.constant 4 : index
    %c0_48 = arith.constant 0 : index
    %c0_49 = arith.constant 0 : index
    %65 = vector.load %arg6[%c4, %c0_48, %c0_49] : memref<6x8x128xf32, #tpu.memory_space<vmem>>, vector<1x8x128xf32>
    %66 = vector.shape_cast %65 : vector<1x8x128xf32> to vector<8x128xf32>
    %67 = vector.shape_cast %31 : vector<8x128xf32> to vector<1x8x128xf32>
    %cst_50 = arith.constant dense<0.000000e+00> : vector<8x128xf32>
    %68 = vector.multi_reduction <add>, %67, %cst_50 [0] : vector<1x8x128xf32> to vector<8x128xf32>
    %69 = arith.addf %66, %68 : vector<8x128xf32>
    %c4_51 = arith.constant 4 : index
    %c0_52 = arith.constant 0 : index
    %c0_53 = arith.constant 0 : index
    %70 = vector.load %arg6[%c4_51, %c0_52, %c0_53] : memref<6x8x128xf32, #tpu.memory_space<vmem>>, vector<1x8x128xf32>
    %71 = vector.shape_cast %70 : vector<1x8x128xf32> to vector<8x128xf32>
    %72 = vector.shape_cast %69 : vector<8x128xf32> to vector<1x8x128xf32>
    tpu.vector_store %arg6[%c4_51, %c0_52, %c0_53], %72 {strides = array<i32>} : memref<6x8x128xf32, #tpu.memory_space<vmem>>, vector<1x8x128xf32>,
    %c5 = arith.constant 5 : index
    %c0_54 = arith.constant 0 : index
    %c0_55 = arith.constant 0 : index
    %73 = vector.load %arg6[%c5, %c0_54, %c0_55] : memref<6x8x128xf32, #tpu.memory_space<vmem>>, vector<1x8x128xf32>
    %74 = vector.shape_cast %73 : vector<1x8x128xf32> to vector<8x128xf32>
    %75 = vector.shape_cast %32 : vector<8x128xf32> to vector<1x8x128xf32>
    %cst_56 = arith.constant dense<0.000000e+00> : vector<8x128xf32>
    %76 = vector.multi_reduction <add>, %75, %cst_56 [0] : vector<1x8x128xf32> to vector<8x128xf32>
    %77 = arith.addf %74, %76 : vector<8x128xf32>
    %c5_57 = arith.constant 5 : index
    %c0_58 = arith.constant 0 : index
    %c0_59 = arith.constant 0 : index
    %78 = vector.load %arg6[%c5_57, %c0_58, %c0_59] : memref<6x8x128xf32, #tpu.memory_space<vmem>>, vector<1x8x128xf32>
    %79 = vector.shape_cast %78 : vector<1x8x128xf32> to vector<8x128xf32>
    %80 = vector.shape_cast %77 : vector<8x128xf32> to vector<1x8x128xf32>
    tpu.vector_store %arg6[%c5_57, %c0_58, %c0_59], %80 {strides = array<i32>} : memref<6x8x128xf32, #tpu.memory_space<vmem>>, vector<1x8x128xf32>,
    %c0_i32_60 = arith.constant 0 : i32
    %81 = arith.cmpi eq, %arg1, %c0_i32_60 : i32
    %82 = arith.extui %81 : i1 to i32
    %c0_i32_61 = arith.constant 0 : i32
    %83 = arith.cmpi ne, %82, %c0_i32_61 : i32
    scf.if %83 {
      %c0_62 = arith.constant 0 : index
      %c0_63 = arith.constant 0 : index
      %c0_64 = arith.constant 0 : index
      %84 = vector.load %arg6[%c0_62, %c0_63, %c0_64] : memref<6x8x128xf32, #tpu.memory_space<vmem>>, vector<6x8x128xf32>
      %c0_65 = arith.constant 0 : index
      %c0_66 = arith.constant 0 : index
      %c0_67 = arith.constant 0 : index
      %c0_68 = arith.constant 0 : index
      %85 = vector.load %arg5[%c0_65, %c0_66, %c0_67, %c0_68] : memref<1x6x8x128xf32, #tpu.memory_space<vmem>>, vector<1x6x8x128xf32>
      %86 = vector.shape_cast %85 : vector<1x6x8x128xf32> to vector<6x8x128xf32>
      %87 = vector.shape_cast %84 : vector<6x8x128xf32> to vector<1x6x8x128xf32>
      tpu.vector_store %arg5[%c0_65, %c0_66, %c0_67, %c0_68], %87 {strides = array<i32>} : memref<1x6x8x128xf32, #tpu.memory_space<vmem>>, vector<1x6x8x128xf32>,
    } else {
    }
    return
  }
  func.func @transform_0(%arg0: i32, %arg1: i32) -> (i32, i32, i32, i32) {
    %c0_i32 = arith.constant 0 : i32
    %c0_i32_0 = arith.constant 0 : i32
    %c0_i32_1 = arith.constant 0 : i32
    return %arg0, %c0_i32, %arg1, %c0_i32_0 : i32, i32, i32, i32
  }
  func.func @transform_1(%arg0: i32, %arg1: i32) -> (i32, i32, i32, i32) {
    %c0_i32 = arith.constant 0 : i32
    %c0_i32_0 = arith.constant 0 : i32
    %c0_i32_1 = arith.constant 0 : i32
    return %arg0, %c0_i32, %arg1, %c0_i32_0 : i32, i32, i32, i32
  }
  func.func @transform_2(%arg0: i32, %arg1: i32) -> i32 {
    %c0_i32 = arith.constant 0 : i32
    %c0_i32_0 = arith.constant 0 : i32
    return %c0_i32 : i32
  }
  func.func @transform_3(%arg0: i32, %arg1: i32) -> (i32, i32, i32, i32) {
    %c0_i32 = arith.constant 0 : i32
    %c0_i32_0 = arith.constant 0 : i32
    %c0_i32_1 = arith.constant 0 : i32
    %c0_i32_2 = arith.constant 0 : i32
    return %arg0, %c0_i32, %c0_i32_0, %c0_i32_1 : i32, i32, i32, i32
  }
}

</mosaic_0001>

<llo_original>
// kernel: _forward_impl.5
$region0: #{_forward_impl.5}
  #allocation0 [shape = 'u32[]', space=smem, size = 0x4, offset = 0x4, fixed_abs, tag = 'smem constant byte address 0x4 - core index']
  #allocation1 [shape = 'u32[72,128]{1,0:T(1,128)}', space=vmem, size = 0x9000, scoped, tag = 'internal scratch']
  #allocation2 [shape = 'f32[6,8,128]{2,1,0:T(8,128)}', space=vmem, size = 0x6000, scoped, tag = 'scratch operand']
  #allocation3 [shape = 'f32[1]{0:T(128)S(6)}', space=smem, size = 0x200, scoped, tag = 'scoped memory for _forward_impl.5']
  %s0 = inlined_call_operand.vmem [shape: f32[2,1,8,128], index: 0, kind: input, shape index: {}]
  %s1 = inlined_call_operand.vmem [shape: f32[2,1,8,128], index: 1, kind: input, shape index: {}]
  %s2 = inlined_call_operand.<no memory space> [shape: f32[1], index: 2, kind: input, shape index: {}]
  %s3 = inlined_call_operand.vmem [shape: f32[2,6,8,128], index: 3, kind: output, shape index: {}]
  %s4 = sld [smem:[#allocation0]]
  $region53: #{_forward_impl.5} parent=0
    _
  %s6 = ssub.s32 1, %s4
  %s7 = scalar_select 0, %s6, %s4
  %8 = sst [smem:[#allocation3]] %s2
  loop: start=0, step=1, limit=4
  $region2: #{_forward_impl.5} parent=0 // loop_pre_header
    _
  $region3: #{_forward_impl.5} parent=0 // loop_header
    %s10 = sphi 0, %s14
    %p11 = scmp.ge.s32.totalorder %s10, 4
    %s17 = sphi 0, %s29
    %s18 = sphi 0, %s25
    %s19 = sphi 0, %s17
    %s20 = sphi 0, %s18
    %s21 = sphi 0, %s19
    %s22 = sphi 0, %s20
    %s34 = sphi 0, %s36
    %s37 = sphi 0, %s34
    %s38 = sphi 0, %s37
    %s54 = sphi 0, %s38
    %s62 = sphi 0, %s64
    %s65 = sphi 0, %s62
    %s66 = sphi 0, %s65
    %s82 = sphi 0, %s66
    %s86 = sphi 0, %s86
    %s88 = sphi 0, %s86
    %s89 = sphi 0, %s88
    %s103 = sphi 0, %s89
    %s109 = sphi 0, %s111
    %s112 = sphi 0, %s109
    %s113 = sphi 0, %s112
    %s129 = sphi 0, %s113
  $region4: #{_forward_impl.5} parent=0 // loop_header_branch
    %13 = sbr.rel (%p11) target = $region8
  $region5: #{_forward_impl.5} parent=0 // loop_body
    %s15 = ssub.s32 %s10, 1
    %s16 = ssub.s32 %s10, 2
    %s23 = sadd.s32 1, %s18
    %p24 = scmp.ge.s32.totalorder %s23, 1
    %s25 = scalar_select %p24, 0, %s23
    %s26 = sadd.s32 1, %s17
    %s27 = scalar_select %p24, %s26, %s17
    %p28 = scmp.ge.s32.totalorder %s27, 2
    %s29 = scalar_select %p28, 0, %s27
    %s30 = ssub.s32 %s17, %s29
    %s31 = ssub.s32 %s18, %s25
    %s32 = sor.u32 %s30, %s31
    %p33 = scmp.eq.s32.totalorder %s32, 0
    %s35 = sadd.s32 %s34, 1
    %s36 = scalar_select %p33, %s34, %s35
    %p39 = pneg %p33
    %p40 = scmp.eq.s32.totalorder %s10, 1
    %p41 = por %p39, %p40
    %p42 = scmp.ne.s32.totalorder %s34, %s37
    %p43 = scmp.eq.s32.totalorder %s10, 0
    %p44 = por %p42, %p43
    %p45 = scmp.ne.s32.totalorder %s34, %s37
    %p46 = scmp.eq.s32.totalorder %s15, 1
    %p47 = por %p45, %p46
    %p48 = scmp.ne.s32.totalorder %s37, %s38
    %p49 = scmp.eq.s32.totalorder %s15, 0
    %p50 = por %p48, %p49
    %p51 = scmp.ne.s32.totalorder %s37, %s38
    %p52 = scmp.eq.s32.totalorder %s16, 1
    %p53 = por %p51, %p52
    %p55 = scmp.ne.s32.totalorder %s38, %s54
    %p56 = scmp.eq.s32.totalorder %s16, 0
    %p57 = por %p55, %p56
    %s58 = ssub.s32 %s17, %s29
    %s59 = ssub.s32 %s18, %s25
    %s60 = sor.u32 %s58, %s59
    %p61 = scmp.eq.s32.totalorder %s60, 0
    %s63 = sadd.s32 %s62, 1
    %s64 = scalar_select %p61, %s62, %s63
    %p67 = pneg %p61
    %p68 = scmp.eq.s32.totalorder %s10, 1
    %p69 = por %p67, %p68
    %p70 = scmp.ne.s32.totalorder %s62, %s65
    %p71 = scmp.eq.s32.totalorder %s10, 0
    %p72 = por %p70, %p71
    %p73 = scmp.ne.s32.totalorder %s62, %s65
    %p74 = scmp.eq.s32.totalorder %s15, 1
    %p75 = por %p73, %p74
    %p76 = scmp.ne.s32.totalorder %s65, %s66
    %p77 = scmp.eq.s32.totalorder %s15, 0
    %p78 = por %p76, %p77
    %p79 = scmp.ne.s32.totalorder %s65, %s66
    %p80 = scmp.eq.s32.totalorder %s16, 1
    %p81 = por %p79, %p80
    %p83 = scmp.ne.s32.totalorder %s66, %s82
    %p84 = scmp.eq.s32.totalorder %s16, 0
    %p85 = por %p83, %p84
    %s87 = sadd.s32 %s86, 1
    %p90 = scmp.eq.s32.totalorder %s10, 1
    %p91 = scmp.ne.s32.totalorder %s86, %s88
    %p92 = scmp.eq.s32.totalorder %s10, 0
    %p93 = por %p91, %p92
    %p94 = scmp.ne.s32.totalorder %s86, %s88
    %p95 = scmp.eq.s32.totalorder %s15, 1
    %p96 = por %p94, %p95
    %p97 = scmp.ne.s32.totalorder %s88, %s89
    %p98 = scmp.eq.s32.totalorder %s15, 0
    %p99 = por %p97, %p98
    %p100 = scmp.ne.s32.totalorder %s88, %s89
    %p101 = scmp.eq.s32.totalorder %s16, 1
    %p102 = por %p100, %p101
    %p104 = scmp.ne.s32.totalorder %s89, %s103
    %p105 = scmp.eq.s32.totalorder %s16, 0
    %p106 = por %p104, %p105
    %s107 = ssub.s32 %s17, %s29
    %p108 = scmp.eq.s32.totalorder %s107, 0
    %s110 = sadd.s32 %s109, 1
    %s111 = scalar_select %p108, %s109, %s110
    %p114 = pneg %p108
    %p115 = scmp.eq.s32.totalorder %s10, 1
    %p116 = por %p114, %p115
    %p117 = scmp.ne.s32.totalorder %s109, %s112
    %p118 = scmp.eq.s32.totalorder %s10, 0
    %p119 = por %p117, %p118
    %p120 = scmp.ne.s32.totalorder %s109, %s112
    %p121 = scmp.eq.s32.totalorder %s15, 1
    %p122 = por %p120, %p121
    %p123 = scmp.ne.s32.totalorder %s112, %s113
    %p124 = scmp.eq.s32.totalorder %s15, 0
    %p125 = por %p123, %p124
    %p126 = scmp.ne.s32.totalorder %s112, %s113
    %p127 = scmp.eq.s32.totalorder %s16, 1
    %p128 = por %p126, %p127
    %p130 = scmp.ne.s32.totalorder %s113, %s129
    %p131 = scmp.eq.s32.totalorder %s16, 0
    %p132 = por %p130, %p131
    %p133 = scmp.le.s32.totalorder 1, %s10
    %p134 = scmp.lt.s32.totalorder %s10, 3
    %p135 = pnand %p133, %p134
    %p136 = pneg %p135
    // Predicated region
    $region9: #{_forward_impl.5} parent=5 // pred_check
      _
    $region10: #{_forward_impl.5} parent=5 // pred_check_branch
      %138 = sbr.rel (%p135) target = $region12
    $region11: #{_forward_impl.5} parent=5 // pred_region
      %s139 = ssub.s32 %s10, 1
      // Predicated region
      $region13: #{_forward_impl.5} parent=11 // pred_check
        %p140 = pneg %p99
      $region14: #{_forward_impl.5} parent=11 // pred_check_branch
        %142 = sbr.rel (%p140) target = $region16
      $region15: #{_forward_impl.5} parent=11 // pred_region
        _
      $region16: #{_forward_impl.5} parent=11 // pred_fallthru
        _
    $region12: #{_forward_impl.5} parent=5 // pred_fallthru
      _
    %p143 = scmp.lt.s32.totalorder %s10, 2
    // Predicated region
    $region17: #{_forward_impl.5} parent=5 // pred_check
      %p144 = pneg %p143
    $region18: #{_forward_impl.5} parent=5 // pred_check_branch
      %146 = sbr.rel (%p144) target = $region20
    $region19: #{_forward_impl.5} parent=5 // pred_region
      // Predicated region
      $region21: #{_forward_impl.5} parent=19 // pred_check
        %p147 = pneg %p44
      $region22: #{_forward_impl.5} parent=19 // pred_check_branch
        %149 = sbr.rel (%p147) target = $region24
      $region23: #{_forward_impl.5} parent=19 // pred_region
        %p150 = scmp.lt.s32.totalorder %s17, 1
        %s151 = scalar_select %p150, %s17, 1
        %p152 = scmp.lt.s32.totalorder %s18, 0
        %s153 = scalar_select %p152, %s18, 0
        %s154 = sadd.s32 %s153, %s151
        %s155 = smul.addr %s154, 8
        %s156 = scalar_lea.vmem %s0, %s155
      $region24: #{_forward_impl.5} parent=19 // pred_fallthru
        _
      // Predicated region
      $region25: #{_forward_impl.5} parent=19 // pred_check
        %p157 = pneg %p72
      $region26: #{_forward_impl.5} parent=19 // pred_check_branch
        %159 = sbr.rel (%p157) target = $region28
      $region27: #{_forward_impl.5} parent=19 // pred_region
        %p160 = scmp.lt.s32.totalorder %s17, 1
        %s161 = scalar_select %p160, %s17, 1
        %p162 = scmp.lt.s32.totalorder %s18, 0
        %s163 = scalar_select %p162, %s18, 0
        %s164 = sadd.s32 %s163, %s161
        %s165 = smul.addr %s164, 8
        %s166 = scalar_lea.vmem %s1, %s165
      $region28: #{_forward_impl.5} parent=19 // pred_fallthru
        _
    $region20: #{_forward_impl.5} parent=5 // pred_fallthru
      _
    %p167 = scmp.le.s32.totalorder 1, %s10
    %p168 = scmp.lt.s32.totalorder %s10, 3
    %p169 = pnand %p167, %p168
    %p170 = pneg %p169
    // Predicated region
    $region29: #{_forward_impl.5} parent=5 // pred_check
      _
    $region30: #{_forward_impl.5} parent=5 // pred_check_branch
      %172 = sbr.rel (%p169) target = $region32
    $region31: #{_forward_impl.5} parent=5 // pred_region
      %s173 = ssub.s32 %s10, 1
      %p174 = scmp.lt.s32.totalorder %s19, 1
      %s175 = scalar_select %p174, %s19, 1
      %p176 = scmp.lt.s32.totalorder %s20, 0
      %s177 = scalar_select %p176, %s20, 0
      %s178 = sadd.s32 %s177, %s175
      %s179 = smul.addr %s178, 8
      %s180 = scalar_lea.vmem %s0, %s179
      %p181 = pneg %p50
      %p182 = pneg %p47
      %p183 = scmp.lt.s32.totalorder %s19, 1
      %s184 = scalar_select %p183, %s19, 1
      %p185 = scmp.lt.s32.totalorder %s20, 0
      %s186 = scalar_select %p185, %s20, 0
      %s187 = sadd.s32 %s186, %s184
      %s188 = smul.addr %s187, 8
      %s189 = scalar_lea.vmem %s1, %s188
      %p190 = pneg %p78
      %p191 = pneg %p75
      %p192 = pneg %p99
      %p193 = pneg %p96
      %p194 = pneg %p125
      %p195 = pneg %p122
      %p196 = scmp.lt.s32.totalorder %s19, 1
      %s197 = scalar_select %p196, %s19, 1
      %s198 = smul.addr %s197, 6
      %s199 = smul.addr %s198, 8
      %s200 = scalar_lea.vmem %s3, %s199
      %p201 = scmp.lt.s32.totalorder %s19, 1
      %s202 = scalar_select %p201, %s19, 1
      %p203 = scmp.lt.s32.totalorder %s20, 0
      %s204 = scalar_select %p203, %s20, 0
      %s205 = sadd.s32 %s204, %s202
      %s206 = smul.addr %s205, 8
      %s207 = scalar_lea.vmem %s0, %s206
      %p208 = scmp.lt.s32.totalorder %s19, 1
      %s209 = scalar_select %p208, %s19, 1
      %p210 = scmp.lt.s32.totalorder %s20, 0
      %s211 = scalar_select %p210, %s20, 0
      %s212 = sadd.s32 %s211, %s209
      %s213 = smul.addr %s212, 8
      %s214 = scalar_lea.vmem %s1, %s213
      %p215 = scmp.lt.s32.totalorder %s19, 1
      %s216 = scalar_select %p215, %s19, 1
      %s217 = smul.addr %s216, 6
      %s218 = smul.addr %s217, 8
      %s219 = scalar_lea.vmem %s3, %s218
      %p220 = scmp.eq.s32.totalorder %s20, 0
      // Predicated region
      $region33: #{_forward_impl.5} parent=31 // pred_check
        %p221 = pneg %p220
      $region34: #{_forward_impl.5} parent=31 // pred_check_branch
        %223 = sbr.rel (%p221) target = $region36
      $region35: #{_forward_impl.5} parent=31 // pred_region
        %224 = vst [vmem:[#allocation2] sm:$0xff] 0.0
        %225 = vst [vmem:[#allocation2 + $0x8] sm:$0xff] 0.0
        %226 = vst [vmem:[#allocation2 + $0x10] sm:$0xff] 0.0
        %227 = vst [vmem:[#allocation2 + $0x18] sm:$0xff] 0.0
        %228 = vst [vmem:[#allocation2 + $0x20] sm:$0xff] 0.0
        %229 = vst [vmem:[#allocation2 + $0x28] sm:$0xff] 0.0
      $region36: #{_forward_impl.5} parent=31 // pred_fallthru
        _
      %s230 = sld [smem:[#allocation3]]
      %v231 = vld [vmem:[%s207] sm:$0xff]
      %v232 = vstv %s230
      %v233 = vmul.f32 %v232, %v231
      %v234 = vld [vmem:[%s214] sm:$0xff]
      %v235 = vsub.f32 %v233, %v234
      %v236 = vmul.f32 %v233, %v233
      %v237 = vmul.f32 %v234, %v234
      %v238 = vmul.f32 %v233, %v234
      %v239 = vmul.f32 %v235, %v235
      %v240 = vld [vmem:[#allocation2] sm:$0xff]
      %v241 = vadd.f32 %v233, 0.0
      %v242 = vadd.f32 %v240, %v241
      %243 = vst [vmem:[#allocation2] sm:$0xff] %v242
      %s244 = scalar_lea.vmem [#allocation2], 8
      %v245 = vld [vmem:[%s244] sm:$0xff]
      %v246 = vadd.f32 %v234, 0.0
      %v247 = vadd.f32 %v245, %v246
      %248 = vst [vmem:[%s244] sm:$0xff] %v247
      %s249 = scalar_lea.vmem [#allocation2], 16
      %v250 = vld [vmem:[%s249] sm:$0xff]
      %v251 = vadd.f32 %v236, 0.0
      %v252 = vadd.f32 %v250, %v251
      %253 = vst [vmem:[%s249] sm:$0xff] %v252
      %s254 = scalar_lea.vmem [#allocation2], 24
      %v255 = vld [vmem:[%s254] sm:$0xff]
      %v256 = vadd.f32 %v237, 0.0
      %v257 = vadd.f32 %v255, %v256
      %258 = vst [vmem:[%s254] sm:$0xff] %v257
      %s259 = scalar_lea.vmem [#allocation2], 32
      %v260 = vld [vmem:[%s259] sm:$0xff]
      %v261 = vadd.f32 %v238, 0.0
      %v262 = vadd.f32 %v260, %v261
      %263 = vst [vmem:[%s259] sm:$0xff] %v262
      %s264 = scalar_lea.vmem [#allocation2], 40
      %v265 = vld [vmem:[%s264] sm:$0xff]
      %v266 = vadd.f32 %v239, 0.0
      %v267 = vadd.f32 %v265, %v266
      %268 = vst [vmem:[%s264] sm:$0xff] %v267
      // Predicated region
      $region37: #{_forward_impl.5} parent=31 // pred_check
        %p269 = pneg %p220
      $region38: #{_forward_impl.5} parent=31 // pred_check_branch
        %271 = sbr.rel (%p269) target = $region40
      $region39: #{_forward_impl.5} parent=31 // pred_region
        %v272 = vld [vmem:[#allocation2] sm:$0xff]
        %v273 = vld [vmem:[#allocation2 + $0x8] sm:$0xff]
        %v274 = vld [vmem:[#allocation2 + $0x10] sm:$0xff]
        %v275 = vld [vmem:[#allocation2 + $0x18] sm:$0xff]
        %v276 = vld [vmem:[#allocation2 + $0x20] sm:$0xff]
        %v277 = vld [vmem:[#allocation2 + $0x28] sm:$0xff]
        %278 = vst [vmem:[%s219] sm:$0xff] %v272
        %279 = vst [vmem:[%s219 + $0x8] sm:$0xff] %v273
        %280 = vst [vmem:[%s219 + $0x10] sm:$0xff] %v274
        %281 = vst [vmem:[%s219 + $0x18] sm:$0xff] %v275
        %282 = vst [vmem:[%s219 + $0x20] sm:$0xff] %v276
        %283 = vst [vmem:[%s219 + $0x28] sm:$0xff] %v277
      $region40: #{_forward_impl.5} parent=31 // pred_fallthru
        _
      %p284 = scmp.lt.s32.totalorder %s19, 1
      %s285 = scalar_select %p284, %s19, 1
      %s286 = smul.addr %s285, 6
      %s287 = smul.addr %s286, 8
      %s288 = scalar_lea.vmem %s3, %s287
      // Predicated region
      $region41: #{_forward_impl.5} parent=31 // pred_check
        %p289 = pneg %p122
      $region42: #{_forward_impl.5} parent=31 // pred_check_branch
        %291 = sbr.rel (%p289) target = $region44
      $region43: #{_forward_impl.5} parent=31 // pred_region
        _
      $region44: #{_forward_impl.5} parent=31 // pred_fallthru
        _
    $region32: #{_forward_impl.5} parent=5 // pred_fallthru
      _
    %p292 = scmp.le.s32.totalorder 2, %s10
    // Predicated region
    $region45: #{_forward_impl.5} parent=5 // pred_check
      %p293 = pneg %p292
    $region46: #{_forward_impl.5} parent=5 // pred_check_branch
      %295 = sbr.rel (%p293) target = $region48
    $region47: #{_forward_impl.5} parent=5 // pred_region
      %s296 = ssub.s32 %s10, 2
      // Predicated region
      $region49: #{_forward_impl.5} parent=47 // pred_check
        %p297 = pneg %p128
      $region50: #{_forward_impl.5} parent=47 // pred_check_branch
        %299 = sbr.rel (%p297) target = $region52
      $region51: #{_forward_impl.5} parent=47 // pred_region
        %p300 = scmp.lt.s32.totalorder %s21, 1
        %s301 = scalar_select %p300, %s21, 1
        %s302 = smul.addr %s301, 6
        %s303 = smul.addr %s302, 8
        %s304 = scalar_lea.vmem %s3, %s303
      $region52: #{_forward_impl.5} parent=47 // pred_fallthru
        _
    $region48: #{_forward_impl.5} parent=5 // pred_fallthru
      _
  $region6: #{_forward_impl.5} parent=0 // loop_footer
    %s14 = sadd.s32 1, %s10
  $region7: #{_forward_impl.5} parent=0 // loop_footer_branch
    %9 = sbr.rel target = $region3
  $region8: #{_forward_impl.5} parent=0 // loop_exit
    _

// kernel: _forward_impl.4
$region0: #{_forward_impl.4}
  #allocation0 [shape = 'u32[]', space=smem, size = 0x4, offset = 0x4, fixed_abs, tag = 'smem constant byte address 0x4 - core index']
  #allocation1 [shape = 'u32[72,128]{1,0:T(1,128)}', space=vmem, size = 0x9000, scoped, tag = 'internal scratch']
  #allocation2 [shape = 'f32[6,8,128]{2,1,0:T(8,128)}', space=vmem, size = 0x6000, scoped, tag = 'scratch operand']
  %s0 = inlined_call_operand.vmem [shape: f32[2,8,8,128], index: 0, kind: input, shape index: {}]
  %s1 = inlined_call_operand.vmem [shape: f32[2,1,8,128], index: 1, kind: input, shape index: {}]
  %s2 = inlined_call_operand.vmem [shape: f32[8], index: 2, kind: input, shape index: {}]
  %s3 = inlined_call_operand.vmem [shape: f32[2,6,8,128], index: 3, kind: output, shape index: {}]
  %s4 = sld [smem:[#allocation0]]
  $region57: #{_forward_impl.4} parent=0
    _
  %s6 = ssub.s32 1, %s4
  %s7 = scalar_select 0, %s6, %s4
  $region1: #{_forward_impl.4} parent=0
    #allocation3 [shape = 'u8[512]{0}', space=smem, size = 0x200, scoped, tag = 'input window, operand 2, single buffered']
    #allocation4 [shape = 's32[2]{0}', space=sflag, size = 0x8, scoped, tag = 'scoped memory for _forward_impl.4']
    %8 = vsyncpa [#allocation4], 0
    loop: start=0, step=1, limit=4
    $region2: #{_forward_impl.4} parent=1 // loop_pre_header
      _
    $region3: #{_forward_impl.4} parent=1 // loop_header
      %s10 = sphi 0, %s14
      %p11 = scmp.ge.s32.totalorder %s10, 4
      %s17 = sphi 0, %s29
      %s18 = sphi 0, %s25
      %s19 = sphi 0, %s17
      %s20 = sphi 0, %s18
      %s21 = sphi 0, %s19
      %s22 = sphi 0, %s20
      %s34 = sphi 0, %s36
      %s37 = sphi 0, %s34
      %s38 = sphi 0, %s37
      %s54 = sphi 0, %s38
      %s62 = sphi 0, %s64
      %s65 = sphi 0, %s62
      %s66 = sphi 0, %s65
      %s82 = sphi 0, %s66
      %s86 = sphi 0, %s86
      %s88 = sphi 0, %s86
      %s89 = sphi 0, %s88
      %s103 = sphi 0, %s89
      %s109 = sphi 0, %s111
      %s112 = sphi 0, %s109
      %s113 = sphi 0, %s112
      %s129 = sphi 0, %s113
    $region4: #{_forward_impl.4} parent=1 // loop_header_branch
      %13 = sbr.rel (%p11) target = $region8
    $region5: #{_forward_impl.4} parent=1 // loop_body
      %s15 = ssub.s32 %s10, 1
      %s16 = ssub.s32 %s10, 2
      %s23 = sadd.s32 1, %s18
      %p24 = scmp.ge.s32.totalorder %s23, 1
      %s25 = scalar_select %p24, 0, %s23
      %s26 = sadd.s32 1, %s17
      %s27 = scalar_select %p24, %s26, %s17
      %p28 = scmp.ge.s32.totalorder %s27, 2
      %s29 = scalar_select %p28, 0, %s27
      %s30 = ssub.s32 %s17, %s29
      %s31 = ssub.s32 %s18, %s25
      %s32 = sor.u32 %s30, %s31
      %p33 = scmp.eq.s32.totalorder %s32, 0
      %s35 = sadd.s32 %s34, 1
      %s36 = scalar_select %p33, %s34, %s35
      %p39 = pneg %p33
      %p40 = scmp.eq.s32.totalorder %s10, 1
      %p41 = por %p39, %p40
      %p42 = scmp.ne.s32.totalorder %s34, %s37
      %p43 = scmp.eq.s32.totalorder %s10, 0
      %p44 = por %p42, %p43
      %p45 = scmp.ne.s32.totalorder %s34, %s37
      %p46 = scmp.eq.s32.totalorder %s15, 1
      %p47 = por %p45, %p46
      %p48 = scmp.ne.s32.totalorder %s37, %s38
      %p49 = scmp.eq.s32.totalorder %s15, 0
      %p50 = por %p48, %p49
      %p51 = scmp.ne.s32.totalorder %s37, %s38
      %p52 = scmp.eq.s32.totalorder %s16, 1
      %p53 = por %p51, %p52
      %p55 = scmp.ne.s32.totalorder %s38, %s54
      %p56 = scmp.eq.s32.totalorder %s16, 0
      %p57 = por %p55, %p56
      %s58 = ssub.s32 %s17, %s29
      %s59 = ssub.s32 %s18, %s25
      %s60 = sor.u32 %s58, %s59
      %p61 = scmp.eq.s32.totalorder %s60, 0
      %s63 = sadd.s32 %s62, 1
      %s64 = scalar_select %p61, %s62, %s63
      %p67 = pneg %p61
      %p68 = scmp.eq.s32.totalorder %s10, 1
      %p69 = por %p67, %p68
      %p70 = scmp.ne.s32.totalorder %s62, %s65
      %p71 = scmp.eq.s32.totalorder %s10, 0
      %p72 = por %p70, %p71
      %p73 = scmp.ne.s32.totalorder %s62, %s65
      %p74 = scmp.eq.s32.totalorder %s15, 1
      %p75 = por %p73, %p74
      %p76 = scmp.ne.s32.totalorder %s65, %s66
      %p77 = scmp.eq.s32.totalorder %s15, 0
      %p78 = por %p76, %p77
      %p79 = scmp.ne.s32.totalorder %s65, %s66
      %p80 = scmp.eq.s32.totalorder %s16, 1
      %p81 = por %p79, %p80
      %p83 = scmp.ne.s32.totalorder %s66, %s82
      %p84 = scmp.eq.s32.totalorder %s16, 0
      %p85 = por %p83, %p84
      %s87 = sadd.s32 %s86, 1
      %p90 = scmp.eq.s32.totalorder %s10, 1
      %p91 = scmp.ne.s32.totalorder %s86, %s88
      %p92 = scmp.eq.s32.totalorder %s10, 0
      %p93 = por %p91, %p92
      %p94 = scmp.ne.s32.totalorder %s86, %s88
      %p95 = scmp.eq.s32.totalorder %s15, 1
      %p96 = por %p94, %p95
      %p97 = scmp.ne.s32.totalorder %s88, %s89
      %p98 = scmp.eq.s32.totalorder %s15, 0
      %p99 = por %p97, %p98
      %p100 = scmp.ne.s32.totalorder %s88, %s89
      %p101 = scmp.eq.s32.totalorder %s16, 1
      %p102 = por %p100, %p101
      %p104 = scmp.ne.s32.totalorder %s89, %s103
      %p105 = scmp.eq.s32.totalorder %s16, 0
      %p106 = por %p104, %p105
      %s107 = ssub.s32 %s17, %s29
      %p108 = scmp.eq.s32.totalorder %s107, 0
      %s110 = sadd.s32 %s109, 1
      %s111 = scalar_select %p108, %s109, %s110
      %p114 = pneg %p108
      %p115 = scmp.eq.s32.totalorder %s10, 1
      %p116 = por %p114, %p115
      %p117 = scmp.ne.s32.totalorder %s109, %s112
      %p118 = scmp.eq.s32.totalorder %s10, 0
      %p119 = por %p117, %p118
      %p120 = scmp.ne.s32.totalorder %s109, %s112
      %p121 = scmp.eq.s32.totalorder %s15, 1
      %p122 = por %p120, %p121
      %p123 = scmp.ne.s32.totalorder %s112, %s113
      %p124 = scmp.eq.s32.totalorder %s15, 0
      %p125 = por %p123, %p124
      %p126 = scmp.ne.s32.totalorder %s112, %s113
      %p127 = scmp.eq.s32.totalorder %s16, 1
      %p128 = por %p126, %p127
      %p130 = scmp.ne.s32.totalorder %s113, %s129
      %p131 = scmp.eq.s32.totalorder %s16, 0
      %p132 = por %p130, %p131
      %p133 = scmp.le.s32.totalorder 1, %s10
      %p134 = scmp.lt.s32.totalorder %s10, 3
      %p135 = pnand %p133, %p134
      %p136 = pneg %p135
      // Predicated region
      $region9: #{_forward_impl.4} parent=5 // pred_check
        _
      $region10: #{_forward_impl.4} parent=5 // pred_check_branch
        %138 = sbr.rel (%p135) target = $region12
      $region11: #{_forward_impl.4} parent=5 // pred_region
        %s139 = ssub.s32 %s10, 1
        // Predicated region
        $region13: #{_forward_impl.4} parent=11 // pred_check
          %p140 = pneg %p99
        $region14: #{_forward_impl.4} parent=11 // pred_check_branch
          %142 = sbr.rel (%p140) target = $region16
        $region15: #{_forward_impl.4} parent=11 // pred_region
          %144 = vsyncadd [#allocation4], 0
          %s146 = sshll.u32 %s2, 4
          %s147 = int_to_ptr.vmem [resolvable:$true] %s146
          %149 = dma.vmem_to_smem %s147, 16, [#allocation3], [#allocation4]
        $region16: #{_forward_impl.4} parent=11 // pred_fallthru
          _
      $region12: #{_forward_impl.4} parent=5 // pred_fallthru
        _
      %p150 = scmp.lt.s32.totalorder %s10, 2
      // Predicated region
      $region17: #{_forward_impl.4} parent=5 // pred_check
        %p151 = pneg %p150
      $region18: #{_forward_impl.4} parent=5 // pred_check_branch
        %153 = sbr.rel (%p151) target = $region20
      $region19: #{_forward_impl.4} parent=5 // pred_region
        // Predicated region
        $region21: #{_forward_impl.4} parent=19 // pred_check
          %p154 = pneg %p44
        $region22: #{_forward_impl.4} parent=19 // pred_check_branch
          %156 = sbr.rel (%p154) target = $region24
        $region23: #{_forward_impl.4} parent=19 // pred_region
          %p157 = scmp.lt.s32.totalorder %s17, 1
          %s158 = scalar_select %p157, %s17, 1
          %p159 = scmp.lt.s32.totalorder %s18, 0
          %s160 = scalar_select %p159, %s18, 0
          %s161 = smul.addr %s158, 8
          %s162 = sadd.s32 %s160, %s161
          %s163 = smul.addr %s162, 8
          %s164 = scalar_lea.vmem %s0, %s163
        $region24: #{_forward_impl.4} parent=19 // pred_fallthru
          _
        // Predicated region
        $region25: #{_forward_impl.4} parent=19 // pred_check
          %p165 = pneg %p72
        $region26: #{_forward_impl.4} parent=19 // pred_check_branch
          %167 = sbr.rel (%p165) target = $region28
        $region27: #{_forward_impl.4} parent=19 // pred_region
          %p168 = scmp.lt.s32.totalorder %s17, 1
          %s169 = scalar_select %p168, %s17, 1
          %p170 = scmp.lt.s32.totalorder %s18, 0
          %s171 = scalar_select %p170, %s18, 0
          %s172 = sadd.s32 %s171, %s169
          %s173 = smul.addr %s172, 8
          %s174 = scalar_lea.vmem %s1, %s173
        $region28: #{_forward_impl.4} parent=19 // pred_fallthru
          _
      $region20: #{_forward_impl.4} parent=5 // pred_fallthru
        _
      %p175 = scmp.le.s32.totalorder 1, %s10
      %p176 = scmp.lt.s32.totalorder %s10, 3
      %p177 = pnand %p175, %p176
      %p178 = pneg %p177
      // Predicated region
      $region29: #{_forward_impl.4} parent=5 // pred_check
        _
      $region30: #{_forward_impl.4} parent=5 // pred_check_branch
        %180 = sbr.rel (%p177) target = $region32
      $region31: #{_forward_impl.4} parent=5 // pred_region
        %s181 = ssub.s32 %s10, 1
        // Predicated region
        $region33: #{_forward_impl.4} parent=31 // pred_check
          %p182 = pneg %p99
        $region34: #{_forward_impl.4} parent=31 // pred_check_branch
          %184 = sbr.rel (%p182) target = $region36
        $region35: #{_forward_impl.4} parent=31 // pred_region
          %186 = dma.done [#allocation4], 16
        $region36: #{_forward_impl.4} parent=31 // pred_fallthru
          _
        %187 = sfence
        %p188 = scmp.lt.s32.totalorder %s19, 1
        %s189 = scalar_select %p188, %s19, 1
        %p190 = scmp.lt.s32.totalorder %s20, 0
        %s191 = scalar_select %p190, %s20, 0
        %s192 = smul.addr %s189, 8
        %s193 = sadd.s32 %s191, %s192
        %s194 = smul.addr %s193, 8
        %s195 = scalar_lea.vmem %s0, %s194
        %p196 = pneg %p50
        %p197 = pneg %p47
        %p198 = scmp.lt.s32.totalorder %s19, 1
        %s199 = scalar_select %p198, %s19, 1
        %p200 = scmp.lt.s32.totalorder %s20, 0
        %s201 = scalar_select %p200, %s20, 0
        %s202 = sadd.s32 %s201, %s199
        %s203 = smul.addr %s202, 8
        %s204 = scalar_lea.vmem %s1, %s203
        %p205 = pneg %p78
        %p206 = pneg %p75
        %p207 = pneg %p99
        %p208 = pneg %p96
        %p209 = pneg %p125
        %p210 = pneg %p122
        %p211 = scmp.lt.s32.totalorder %s19, 1
        %s212 = scalar_select %p211, %s19, 1
        %s213 = smul.addr %s212, 6
        %s214 = smul.addr %s213, 8
        %s215 = scalar_lea.vmem %s3, %s214
        %p216 = scmp.lt.s32.totalorder %s19, 1
        %s217 = scalar_select %p216, %s19, 1
        %p218 = scmp.lt.s32.totalorder %s20, 0
        %s219 = scalar_select %p218, %s20, 0
        %s220 = smul.addr %s217, 8
        %s221 = sadd.s32 %s219, %s220
        %s222 = smul.addr %s221, 8
        %s223 = scalar_lea.vmem %s0, %s222
        %p224 = scmp.lt.s32.totalorder %s19, 1
        %s225 = scalar_select %p224, %s19, 1
        %p226 = scmp.lt.s32.totalorder %s20, 0
        %s227 = scalar_select %p226, %s20, 0
        %s228 = sadd.s32 %s227, %s225
        %s229 = smul.addr %s228, 8
        %s230 = scalar_lea.vmem %s1, %s229
        %p231 = scmp.lt.s32.totalorder %s19, 1
        %s232 = scalar_select %p231, %s19, 1
        %s233 = smul.addr %s232, 6
        %s234 = smul.addr %s233, 8
        %s235 = scalar_lea.vmem %s3, %s234
        %p236 = scmp.eq.s32.totalorder %s20, 0
        // Predicated region
        $region37: #{_forward_impl.4} parent=31 // pred_check
          %p237 = pneg %p236
        $region38: #{_forward_impl.4} parent=31 // pred_check_branch
          %239 = sbr.rel (%p237) target = $region40
        $region39: #{_forward_impl.4} parent=31 // pred_region
          %240 = vst [vmem:[#allocation2] sm:$0xff] 0.0
          %241 = vst [vmem:[#allocation2 + $0x8] sm:$0xff] 0.0
          %242 = vst [vmem:[#allocation2 + $0x10] sm:$0xff] 0.0
          %243 = vst [vmem:[#allocation2 + $0x18] sm:$0xff] 0.0
          %244 = vst [vmem:[#allocation2 + $0x20] sm:$0xff] 0.0
          %245 = vst [vmem:[#allocation2 + $0x28] sm:$0xff] 0.0
        $region40: #{_forward_impl.4} parent=31 // pred_fallthru
          _
        %s246 = sld [smem:[#allocation3]]
        %v247 = vld [vmem:[%s223] sm:$0xff]
        %v248 = vstv %s246
        %v249 = vmul.f32 %v248, %v247
        %s250 = sld [smem:[#allocation3 + $0x1]]
        %s251 = scalar_lea.vmem %s223, 8
        %v252 = vld [vmem:[%s251] sm:$0xff]
        %v253 = vstv %s250
        %v254 = vmul.f32 %v253, %v252
        %v255 = vadd.f32 %v249, %v254
        %s256 = sld [smem:[#allocation3 + $0x2]]
        %s257 = scalar_lea.vmem %s223, 16
        %v258 = vld [vmem:[%s257] sm:$0xff]
        %v259 = vstv %s256
        %v260 = vmul.f32 %v259, %v258
        %v261 = vadd.f32 %v255, %v260
        %s262 = sld [smem:[#allocation3 + $0x3]]
        %s263 = scalar_lea.vmem %s223, 24
        %v264 = vld [vmem:[%s263] sm:$0xff]
        %v265 = vstv %s262
        %v266 = vmul.f32 %v265, %v264
        %v267 = vadd.f32 %v261, %v266
        %s268 = sld [smem:[#allocation3 + $0x4]]
        %s269 = scalar_lea.vmem %s223, 32
        %v270 = vld [vmem:[%s269] sm:$0xff]
        %v271 = vstv %s268
        %v272 = vmul.f32 %v271, %v270
        %v273 = vadd.f32 %v267, %v272
        %s274 = sld [smem:[#allocation3 + $0x5]]
        %s275 = scalar_lea.vmem %s223, 40
        %v276 = vld [vmem:[%s275] sm:$0xff]
        %v277 = vstv %s274
        %v278 = vmul.f32 %v277, %v276
        %v279 = vadd.f32 %v273, %v278
        %s280 = sld [smem:[#allocation3 + $0x6]]
        %s281 = scalar_lea.vmem %s223, 48
        %v282 = vld [vmem:[%s281] sm:$0xff]
        %v283 = vstv %s280
        %v284 = vmul.f32 %v283, %v282
        %v285 = vadd.f32 %v279, %v284
        %s286 = sld [smem:[#allocation3 + $0x7]]
        %s287 = scalar_lea.vmem %s223, 56
        %v288 = vld [vmem:[%s287] sm:$0xff]
        %v289 = vstv %s286
        %v290 = vmul.f32 %v289, %v288
        %v291 = vadd.f32 %v285, %v290
        %v292 = vld [vmem:[%s230] sm:$0xff]
        %v293 = vsub.f32 %v291, %v292
        %v294 = vmul.f32 %v291, %v291
        %v295 = vmul.f32 %v292, %v292
        %v296 = vmul.f32 %v291, %v292
        %v297 = vmul.f32 %v293, %v293
        %v298 = vld [vmem:[#allocation2] sm:$0xff]
        %v299 = vadd.f32 %v291, 0.0
        %v300 = vadd.f32 %v298, %v299
        %301 = vst [vmem:[#allocation2] sm:$0xff] %v300
        %s302 = scalar_lea.vmem [#allocation2], 8
        %v303 = vld [vmem:[%s302] sm:$0xff]
        %v304 = vadd.f32 %v292, 0.0
        %v305 = vadd.f32 %v303, %v304
        %306 = vst [vmem:[%s302] sm:$0xff] %v305
        %s307 = scalar_lea.vmem [#allocation2], 16
        %v308 = vld [vmem:[%s307] sm:$0xff]
        %v309 = vadd.f32 %v294, 0.0
        %v310 = vadd.f32 %v308, %v309
        %311 = vst [vmem:[%s307] sm:$0xff] %v310
        %s312 = scalar_lea.vmem [#allocation2], 24
        %v313 = vld [vmem:[%s312] sm:$0xff]
        %v314 = vadd.f32 %v295, 0.0
        %v315 = vadd.f32 %v313, %v314
        %316 = vst [vmem:[%s312] sm:$0xff] %v315
        %s317 = scalar_lea.vmem [#allocation2], 32
        %v318 = vld [vmem:[%s317] sm:$0xff]
        %v319 = vadd.f32 %v296, 0.0
        %v320 = vadd.f32 %v318, %v319
        %321 = vst [vmem:[%s317] sm:$0xff] %v320
        %s322 = scalar_lea.vmem [#allocation2], 40
        %v323 = vld [vmem:[%s322] sm:$0xff]
        %v324 = vadd.f32 %v297, 0.0
        %v325 = vadd.f32 %v323, %v324
        %326 = vst [vmem:[%s322] sm:$0xff] %v325
        // Predicated region
        $region41: #{_forward_impl.4} parent=31 // pred_check
          %p327 = pneg %p236
        $region42: #{_forward_impl.4} parent=31 // pred_check_branch
          %329 = sbr.rel (%p327) target = $region44
        $region43: #{_forward_impl.4} parent=31 // pred_region
          %v330 = vld [vmem:[#allocation2] sm:$0xff]
          %v331 = vld [vmem:[#allocation2 + $0x8] sm:$0xff]
          %v332 = vld [vmem:[#allocation2 + $0x10] sm:$0xff]
          %v333 = vld [vmem:[#allocation2 + $0x18] sm:$0xff]
          %v334 = vld [vmem:[#allocation2 + $0x20] sm:$0xff]
          %v335 = vld [vmem:[#allocation2 + $0x28] sm:$0xff]
          %336 = vst [vmem:[%s235] sm:$0xff] %v330
          %337 = vst [vmem:[%s235 + $0x8] sm:$0xff] %v331
          %338 = vst [vmem:[%s235 + $0x10] sm:$0xff] %v332
          %339 = vst [vmem:[%s235 + $0x18] sm:$0xff] %v333
          %340 = vst [vmem:[%s235 + $0x20] sm:$0xff] %v334
          %341 = vst [vmem:[%s235 + $0x28] sm:$0xff] %v335
        $region44: #{_forward_impl.4} parent=31 // pred_fallthru
          _
        %p342 = scmp.lt.s32.totalorder %s19, 1
        %s343 = scalar_select %p342, %s19, 1
        %s344 = smul.addr %s343, 6
        %s345 = smul.addr %s344, 8
        %s346 = scalar_lea.vmem %s3, %s345
        // Predicated region
        $region45: #{_forward_impl.4} parent=31 // pred_check
          %p347 = pneg %p122
        $region46: #{_forward_impl.4} parent=31 // pred_check_branch
          %349 = sbr.rel (%p347) target = $region48
        $region47: #{_forward_impl.4} parent=31 // pred_region
          _
        $region48: #{_forward_impl.4} parent=31 // pred_fallthru
          _
      $region32: #{_forward_impl.4} parent=5 // pred_fallthru
        _
      %p350 = scmp.le.s32.totalorder 2, %s10
      // Predicated region
      $region49: #{_forward_impl.4} parent=5 // pred_check
        %p351 = pneg %p350
      $region50: #{_forward_impl.4} parent=5 // pred_check_branch
        %353 = sbr.rel (%p351) target = $region52
      $region51: #{_forward_impl.4} parent=5 // pred_region
        %s354 = ssub.s32 %s10, 2
        // Predicated region
        $region53: #{_forward_impl.4} parent=51 // pred_check
          %p355 = pneg %p128
        $region54: #{_forward_impl.4} parent=51 // pred_check_branch
          %357 = sbr.rel (%p355) target = $region56
        $region55: #{_forward_impl.4} parent=51 // pred_region
          %p358 = scmp.lt.s32.totalorder %s21, 1
          %s359 = scalar_select %p358, %s21, 1
          %s360 = smul.addr %s359, 6
          %s361 = smul.addr %s360, 8
          %s362 = scalar_lea.vmem %s3, %s361
        $region56: #{_forward_impl.4} parent=51 // pred_fallthru
          _
      $region52: #{_forward_impl.4} parent=5 // pred_fallthru
        _
    $region6: #{_forward_impl.4} parent=1 // loop_footer
      %s14 = sadd.s32 1, %s10
    $region7: #{_forward_impl.4} parent=1 // loop_footer_branch
      %9 = sbr.rel target = $region3
    $region8: #{_forward_impl.4} parent=1 // loop_exit
      _
    %363 = vsyncpa [#allocation4], 1
    %s364 = scalar_lea.sflag [#allocation4], 1
    %365 = vsyncpa %s364, 1

// kernel: _forward_impl.3
$region0: #{_forward_impl.3}
  #allocation0 [shape = 'u32[]', space=smem, size = 0x4, offset = 0x4, fixed_abs, tag = 'smem constant byte address 0x4 - core index']
  #allocation1 [shape = 'u32[72,128]{1,0:T(1,128)}', space=vmem, size = 0x9000, scoped, tag = 'internal scratch']
  #allocation2 [shape = 'f32[6,8,128]{2,1,0:T(8,128)}', space=vmem, size = 0x6000, scoped, tag = 'scratch operand']
  %s0 = inlined_call_operand.vmem [shape: f32[2,4,8,128], index: 0, kind: input, shape index: {}]
  %s1 = inlined_call_operand.vmem [shape: f32[2,1,8,128], index: 1, kind: input, shape index: {}]
  %s2 = inlined_call_operand.vmem [shape: f32[4], index: 2, kind: input, shape index: {}]
  %s3 = inlined_call_operand.vmem [shape: f32[2,6,8,128], index: 3, kind: output, shape index: {}]
  %s4 = sld [smem:[#allocation0]]
  $region57: #{_forward_impl.3} parent=0
    _
  %s6 = ssub.s32 1, %s4
  %s7 = scalar_select 0, %s6, %s4
  $region1: #{_forward_impl.3} parent=0
    #allocation3 [shape = 'u8[512]{0}', space=smem, size = 0x200, scoped, tag = 'input window, operand 2, single buffered']
    #allocation4 [shape = 's32[2]{0}', space=sflag, size = 0x8, scoped, tag = 'scoped memory for _forward_impl.3']
    %8 = vsyncpa [#allocation4], 0
    loop: start=0, step=1, limit=4
    $region2: #{_forward_impl.3} parent=1 // loop_pre_header
      _
    $region3: #{_forward_impl.3} parent=1 // loop_header
      %s10 = sphi 0, %s14
      %p11 = scmp.ge.s32.totalorder %s10, 4
      %s17 = sphi 0, %s29
      %s18 = sphi 0, %s25
      %s19 = sphi 0, %s17
      %s20 = sphi 0, %s18
      %s21 = sphi 0, %s19
      %s22 = sphi 0, %s20
      %s34 = sphi 0, %s36
      %s37 = sphi 0, %s34
      %s38 = sphi 0, %s37
      %s54 = sphi 0, %s38
      %s62 = sphi 0, %s64
      %s65 = sphi 0, %s62
      %s66 = sphi 0, %s65
      %s82 = sphi 0, %s66
      %s86 = sphi 0, %s86
      %s88 = sphi 0, %s86
      %s89 = sphi 0, %s88
      %s103 = sphi 0, %s89
      %s109 = sphi 0, %s111
      %s112 = sphi 0, %s109
      %s113 = sphi 0, %s112
      %s129 = sphi 0, %s113
    $region4: #{_forward_impl.3} parent=1 // loop_header_branch
      %13 = sbr.rel (%p11) target = $region8
    $region5: #{_forward_impl.3} parent=1 // loop_body
      %s15 = ssub.s32 %s10, 1
      %s16 = ssub.s32 %s10, 2
      %s23 = sadd.s32 1, %s18
      %p24 = scmp.ge.s32.totalorder %s23, 1
      %s25 = scalar_select %p24, 0, %s23
      %s26 = sadd.s32 1, %s17
      %s27 = scalar_select %p24, %s26, %s17
      %p28 = scmp.ge.s32.totalorder %s27, 2
      %s29 = scalar_select %p28, 0, %s27
      %s30 = ssub.s32 %s17, %s29
      %s31 = ssub.s32 %s18, %s25
      %s32 = sor.u32 %s30, %s31
      %p33 = scmp.eq.s32.totalorder %s32, 0
      %s35 = sadd.s32 %s34, 1
      %s36 = scalar_select %p33, %s34, %s35
      %p39 = pneg %p33
      %p40 = scmp.eq.s32.totalorder %s10, 1
      %p41 = por %p39, %p40
      %p42 = scmp.ne.s32.totalorder %s34, %s37
      %p43 = scmp.eq.s32.totalorder %s10, 0
      %p44 = por %p42, %p43
      %p45 = scmp.ne.s32.totalorder %s34, %s37
      %p46 = scmp.eq.s32.totalorder %s15, 1
      %p47 = por %p45, %p46
      %p48 = scmp.ne.s32.totalorder %s37, %s38
      %p49 = scmp.eq.s32.totalorder %s15, 0
      %p50 = por %p48, %p49
      %p51 = scmp.ne.s32.totalorder %s37, %s38
      %p52 = scmp.eq.s32.totalorder %s16, 1
      %p53 = por %p51, %p52
      %p55 = scmp.ne.s32.totalorder %s38, %s54
      %p56 = scmp.eq.s32.totalorder %s16, 0
      %p57 = por %p55, %p56
      %s58 = ssub.s32 %s17, %s29
      %s59 = ssub.s32 %s18, %s25
      %s60 = sor.u32 %s58, %s59
      %p61 = scmp.eq.s32.totalorder %s60, 0
      %s63 = sadd.s32 %s62, 1
      %s64 = scalar_select %p61, %s62, %s63
      %p67 = pneg %p61
      %p68 = scmp.eq.s32.totalorder %s10, 1
      %p69 = por %p67, %p68
      %p70 = scmp.ne.s32.totalorder %s62, %s65
      %p71 = scmp.eq.s32.totalorder %s10, 0
      %p72 = por %p70, %p71
      %p73 = scmp.ne.s32.totalorder %s62, %s65
      %p74 = scmp.eq.s32.totalorder %s15, 1
      %p75 = por %p73, %p74
      %p76 = scmp.ne.s32.totalorder %s65, %s66
      %p77 = scmp.eq.s32.totalorder %s15, 0
      %p78 = por %p76, %p77
      %p79 = scmp.ne.s32.totalorder %s65, %s66
      %p80 = scmp.eq.s32.totalorder %s16, 1
      %p81 = por %p79, %p80
      %p83 = scmp.ne.s32.totalorder %s66, %s82
      %p84 = scmp.eq.s32.totalorder %s16, 0
      %p85 = por %p83, %p84
      %s87 = sadd.s32 %s86, 1
      %p90 = scmp.eq.s32.totalorder %s10, 1
      %p91 = scmp.ne.s32.totalorder %s86, %s88
      %p92 = scmp.eq.s32.totalorder %s10, 0
      %p93 = por %p91, %p92
      %p94 = scmp.ne.s32.totalorder %s86, %s88
      %p95 = scmp.eq.s32.totalorder %s15, 1
      %p96 = por %p94, %p95
      %p97 = scmp.ne.s32.totalorder %s88, %s89
      %p98 = scmp.eq.s32.totalorder %s15, 0
      %p99 = por %p97, %p98
      %p100 = scmp.ne.s32.totalorder %s88, %s89
      %p101 = scmp.eq.s32.totalorder %s16, 1
      %p102 = por %p100, %p101
      %p104 = scmp.ne.s32.totalorder %s89, %s103
      %p105 = scmp.eq.s32.totalorder %s16, 0
      %p106 = por %p104, %p105
      %s107 = ssub.s32 %s17, %s29
      %p108 = scmp.eq.s32.totalorder %s107, 0
      %s110 = sadd.s32 %s109, 1
      %s111 = scalar_select %p108, %s109, %s110
      %p114 = pneg %p108
      %p115 = scmp.eq.s32.totalorder %s10, 1
      %p116 = por %p114, %p115
      %p117 = scmp.ne.s32.totalorder %s109, %s112
      %p118 = scmp.eq.s32.totalorder %s10, 0
      %p119 = por %p117, %p118
      %p120 = scmp.ne.s32.totalorder %s109, %s112
      %p121 = scmp.eq.s32.totalorder %s15, 1
      %p122 = por %p120, %p121
      %p123 = scmp.ne.s32.totalorder %s112, %s113
      %p124 = scmp.eq.s32.totalorder %s15, 0
      %p125 = por %p123, %p124
      %p126 = scmp.ne.s32.totalorder %s112, %s113
      %p127 = scmp.eq.s32.totalorder %s16, 1
      %p128 = por %p126, %p127
      %p130 = scmp.ne.s32.totalorder %s113, %s129
      %p131 = scmp.eq.s32.totalorder %s16, 0
      %p132 = por %p130, %p131
      %p133 = scmp.le.s32.totalorder 1, %s10
      %p134 = scmp.lt.s32.totalorder %s10, 3
      %p135 = pnand %p133, %p134
      %p136 = pneg %p135
      // Predicated region
      $region9: #{_forward_impl.3} parent=5 // pred_check
        _
      $region10: #{_forward_impl.3} parent=5 // pred_check_branch
        %138 = sbr.rel (%p135) target = $region12
      $region11: #{_forward_impl.3} parent=5 // pred_region
        %s139 = ssub.s32 %s10, 1
        // Predicated region
        $region13: #{_forward_impl.3} parent=11 // pred_check
          %p140 = pneg %p99
        $region14: #{_forward_impl.3} parent=11 // pred_check_branch
          %142 = sbr.rel (%p140) target = $region16
        $region15: #{_forward_impl.3} parent=11 // pred_region
          %144 = vsyncadd [#allocation4], 0
          %s146 = sshll.u32 %s2, 4
          %s147 = int_to_ptr.vmem [resolvable:$true] %s146
          %149 = dma.vmem_to_smem %s147, 16, [#allocation3], [#allocation4]
        $region16: #{_forward_impl.3} parent=11 // pred_fallthru
          _
      $region12: #{_forward_impl.3} parent=5 // pred_fallthru
        _
      %p150 = scmp.lt.s32.totalorder %s10, 2
      // Predicated region
      $region17: #{_forward_impl.3} parent=5 // pred_check
        %p151 = pneg %p150
      $region18: #{_forward_impl.3} parent=5 // pred_check_branch
        %153 = sbr.rel (%p151) target = $region20
      $region19: #{_forward_impl.3} parent=5 // pred_region
        // Predicated region
        $region21: #{_forward_impl.3} parent=19 // pred_check
          %p154 = pneg %p44
        $region22: #{_forward_impl.3} parent=19 // pred_check_branch
          %156 = sbr.rel (%p154) target = $region24
        $region23: #{_forward_impl.3} parent=19 // pred_region
          %p157 = scmp.lt.s32.totalorder %s17, 1
          %s158 = scalar_select %p157, %s17, 1
          %p159 = scmp.lt.s32.totalorder %s18, 0
          %s160 = scalar_select %p159, %s18, 0
          %s161 = smul.addr %s158, 4
          %s162 = sadd.s32 %s160, %s161
          %s163 = smul.addr %s162, 8
          %s164 = scalar_lea.vmem %s0, %s163
        $region24: #{_forward_impl.3} parent=19 // pred_fallthru
          _
        // Predicated region
        $region25: #{_forward_impl.3} parent=19 // pred_check
          %p165 = pneg %p72
        $region26: #{_forward_impl.3} parent=19 // pred_check_branch
          %167 = sbr.rel (%p165) target = $region28
        $region27: #{_forward_impl.3} parent=19 // pred_region
          %p168 = scmp.lt.s32.totalorder %s17, 1
          %s169 = scalar_select %p168, %s17, 1
          %p170 = scmp.lt.s32.totalorder %s18, 0
          %s171 = scalar_select %p170, %s18, 0
          %s172 = sadd.s32 %s171, %s169
          %s173 = smul.addr %s172, 8
          %s174 = scalar_lea.vmem %s1, %s173
        $region28: #{_forward_impl.3} parent=19 // pred_fallthru
          _
      $region20: #{_forward_impl.3} parent=5 // pred_fallthru
        _
      %p175 = scmp.le.s32.totalorder 1, %s10
      %p176 = scmp.lt.s32.totalorder %s10, 3
      %p177 = pnand %p175, %p176
      %p178 = pneg %p177
      // Predicated region
      $region29: #{_forward_impl.3} parent=5 // pred_check
        _
      $region30: #{_forward_impl.3} parent=5 // pred_check_branch
        %180 = sbr.rel (%p177) target = $region32
      $region31: #{_forward_impl.3} parent=5 // pred_region
        %s181 = ssub.s32 %s10, 1
        // Predicated region
        $region33: #{_forward_impl.3} parent=31 // pred_check
          %p182 = pneg %p99
        $region34: #{_forward_impl.3} parent=31 // pred_check_branch
          %184 = sbr.rel (%p182) target = $region36
        $region35: #{_forward_impl.3} parent=31 // pred_region
          %186 = dma.done [#allocation4], 16
        $region36: #{_forward_impl.3} parent=31 // pred_fallthru
          _
        %187 = sfence
        %p188 = scmp.lt.s32.totalorder %s19, 1
        %s189 = scalar_select %p188, %s19, 1
        %p190 = scmp.lt.s32.totalorder %s20, 0
        %s191 = scalar_select %p190, %s20, 0
        %s192 = smul.addr %s189, 4
        %s193 = sadd.s32 %s191, %s192
        %s194 = smul.addr %s193, 8
        %s195 = scalar_lea.vmem %s0, %s194
        %p196 = pneg %p50
        %p197 = pneg %p47
        %p198 = scmp.lt.s32.totalorder %s19, 1
        %s199 = scalar_select %p198, %s19, 1
        %p200 = scmp.lt.s32.totalorder %s20, 0
        %s201 = scalar_select %p200, %s20, 0
        %s202 = sadd.s32 %s201, %s199
        %s203 = smul.addr %s202, 8
        %s204 = scalar_lea.vmem %s1, %s203
        %p205 = pneg %p78
        %p206 = pneg %p75
        %p207 = pneg %p99
        %p208 = pneg %p96
        %p209 = pneg %p125
        %p210 = pneg %p122
        %p211 = scmp.lt.s32.totalorder %s19, 1
        %s212 = scalar_select %p211, %s19, 1
        %s213 = smul.addr %s212, 6
        %s214 = smul.addr %s213, 8
        %s215 = scalar_lea.vmem %s3, %s214
        %p216 = scmp.lt.s32.totalorder %s19, 1
        %s217 = scalar_select %p216, %s19, 1
        %p218 = scmp.lt.s32.totalorder %s20, 0
        %s219 = scalar_select %p218, %s20, 0
        %s220 = smul.addr %s217, 4
        %s221 = sadd.s32 %s219, %s220
        %s222 = smul.addr %s221, 8
        %s223 = scalar_lea.vmem %s0, %s222
        %p224 = scmp.lt.s32.totalorder %s19, 1
        %s225 = scalar_select %p224, %s19, 1
        %p226 = scmp.lt.s32.totalorder %s20, 0
        %s227 = scalar_select %p226, %s20, 0
        %s228 = sadd.s32 %s227, %s225
        %s229 = smul.addr %s228, 8
        %s230 = scalar_lea.vmem %s1, %s229
        %p231 = scmp.lt.s32.totalorder %s19, 1
        %s232 = scalar_select %p231, %s19, 1
        %s233 = smul.addr %s232, 6
        %s234 = smul.addr %s233, 8
        %s235 = scalar_lea.vmem %s3, %s234
        %p236 = scmp.eq.s32.totalorder %s20, 0
        // Predicated region
        $region37: #{_forward_impl.3} parent=31 // pred_check
          %p237 = pneg %p236
        $region38: #{_forward_impl.3} parent=31 // pred_check_branch
          %239 = sbr.rel (%p237) target = $region40
        $region39: #{_forward_impl.3} parent=31 // pred_region
          %240 = vst [vmem:[#allocation2] sm:$0xff] 0.0
          %241 = vst [vmem:[#allocation2 + $0x8] sm:$0xff] 0.0
          %242 = vst [vmem:[#allocation2 + $0x10] sm:$0xff] 0.0
          %243 = vst [vmem:[#allocation2 + $0x18] sm:$0xff] 0.0
          %244 = vst [vmem:[#allocation2 + $0x20] sm:$0xff] 0.0
          %245 = vst [vmem:[#allocation2 + $0x28] sm:$0xff] 0.0
        $region40: #{_forward_impl.3} parent=31 // pred_fallthru
          _
        %s246 = sld [smem:[#allocation3]]
        %v247 = vld [vmem:[%s223] sm:$0xff]
        %v248 = vstv %s246
        %v249 = vmul.f32 %v248, %v247
        %s250 = sld [smem:[#allocation3 + $0x1]]
        %s251 = scalar_lea.vmem %s223, 8
        %v252 = vld [vmem:[%s251] sm:$0xff]
        %v253 = vstv %s250
        %v254 = vmul.f32 %v253, %v252
        %v255 = vadd.f32 %v249, %v254
        %s256 = sld [smem:[#allocation3 + $0x2]]
        %s257 = scalar_lea.vmem %s223, 16
        %v258 = vld [vmem:[%s257] sm:$0xff]
        %v259 = vstv %s256
        %v260 = vmul.f32 %v259, %v258
        %v261 = vadd.f32 %v255, %v260
        %s262 = sld [smem:[#allocation3 + $0x3]]
        %s263 = scalar_lea.vmem %s223, 24
        %v264 = vld [vmem:[%s263] sm:$0xff]
        %v265 = vstv %s262
        %v266 = vmul.f32 %v265, %v264
        %v267 = vadd.f32 %v261, %v266
        %v268 = vld [vmem:[%s230] sm:$0xff]
        %v269 = vsub.f32 %v267, %v268
        %v270 = vmul.f32 %v267, %v267
        %v271 = vmul.f32 %v268, %v268
        %v272 = vmul.f32 %v267, %v268
        %v273 = vmul.f32 %v269, %v269
        %v274 = vld [vmem:[#allocation2] sm:$0xff]
        %v275 = vadd.f32 %v267, 0.0
        %v276 = vadd.f32 %v274, %v275
        %277 = vst [vmem:[#allocation2] sm:$0xff] %v276
        %s278 = scalar_lea.vmem [#allocation2], 8
        %v279 = vld [vmem:[%s278] sm:$0xff]
        %v280 = vadd.f32 %v268, 0.0
        %v281 = vadd.f32 %v279, %v280
        %282 = vst [vmem:[%s278] sm:$0xff] %v281
        %s283 = scalar_lea.vmem [#allocation2], 16
        %v284 = vld [vmem:[%s283] sm:$0xff]
        %v285 = vadd.f32 %v270, 0.0
        %v286 = vadd.f32 %v284, %v285
        %287 = vst [vmem:[%s283] sm:$0xff] %v286
        %s288 = scalar_lea.vmem [#allocation2], 24
        %v289 = vld [vmem:[%s288] sm:$0xff]
        %v290 = vadd.f32 %v271, 0.0
        %v291 = vadd.f32 %v289, %v290
        %292 = vst [vmem:[%s288] sm:$0xff] %v291
        %s293 = scalar_lea.vmem [#allocation2], 32
        %v294 = vld [vmem:[%s293] sm:$0xff]
        %v295 = vadd.f32 %v272, 0.0
        %v296 = vadd.f32 %v294, %v295
        %297 = vst [vmem:[%s293] sm:$0xff] %v296
        %s298 = scalar_lea.vmem [#allocation2], 40
        %v299 = vld [vmem:[%s298] sm:$0xff]
        %v300 = vadd.f32 %v273, 0.0
        %v301 = vadd.f32 %v299, %v300
        %302 = vst [vmem:[%s298] sm:$0xff] %v301
        // Predicated region
        $region41: #{_forward_impl.3} parent=31 // pred_check
          %p303 = pneg %p236
        $region42: #{_forward_impl.3} parent=31 // pred_check_branch
          %305 = sbr.rel (%p303) target = $region44
        $region43: #{_forward_impl.3} parent=31 // pred_region
          %v306 = vld [vmem:[#allocation2] sm:$0xff]
          %v307 = vld [vmem:[#allocation2 + $0x8] sm:$0xff]
          %v308 = vld [vmem:[#allocation2 + $0x10] sm:$0xff]
          %v309 = vld [vmem:[#allocation2 + $0x18] sm:$0xff]
          %v310 = vld [vmem:[#allocation2 + $0x20] sm:$0xff]
          %v311 = vld [vmem:[#allocation2 + $0x28] sm:$0xff]
          %312 = vst [vmem:[%s235] sm:$0xff] %v306
          %313 = vst [vmem:[%s235 + $0x8] sm:$0xff] %v307
          %314 = vst [vmem:[%s235 + $0x10] sm:$0xff] %v308
          %315 = vst [vmem:[%s235 + $0x18] sm:$0xff] %v309
          %316 = vst [vmem:[%s235 + $0x20] sm:$0xff] %v310
          %317 = vst [vmem:[%s235 + $0x28] sm:$0xff] %v311
        $region44: #{_forward_impl.3} parent=31 // pred_fallthru
          _
        %p318 = scmp.lt.s32.totalorder %s19, 1
        %s319 = scalar_select %p318, %s19, 1
        %s320 = smul.addr %s319, 6
        %s321 = smul.addr %s320, 8
        %s322 = scalar_lea.vmem %s3, %s321
        // Predicated region
        $region45: #{_forward_impl.3} parent=31 // pred_check
          %p323 = pneg %p122
        $region46: #{_forward_impl.3} parent=31 // pred_check_branch
          %325 = sbr.rel (%p323) target = $region48
        $region47: #{_forward_impl.3} parent=31 // pred_region
          _
        $region48: #{_forward_impl.3} parent=31 // pred_fallthru
          _
      $region32: #{_forward_impl.3} parent=5 // pred_fallthru
        _
      %p326 = scmp.le.s32.totalorder 2, %s10
      // Predicated region
      $region49: #{_forward_impl.3} parent=5 // pred_check
        %p327 = pneg %p326
      $region50: #{_forward_impl.3} parent=5 // pred_check_branch
        %329 = sbr.rel (%p327) target = $region52
      $region51: #{_forward_impl.3} parent=5 // pred_region
        %s330 = ssub.s32 %s10, 2
        // Predicated region
        $region53: #{_forward_impl.3} parent=51 // pred_check
          %p331 = pneg %p128
        $region54: #{_forward_impl.3} parent=51 // pred_check_branch
          %333 = sbr.rel (%p331) target = $region56
        $region55: #{_forward_impl.3} parent=51 // pred_region
          %p334 = scmp.lt.s32.totalorder %s21, 1
          %s335 = scalar_select %p334, %s21, 1
          %s336 = smul.addr %s335, 6
          %s337 = smul.addr %s336, 8
          %s338 = scalar_lea.vmem %s3, %s337
        $region56: #{_forward_impl.3} parent=51 // pred_fallthru
          _
      $region52: #{_forward_impl.3} parent=5 // pred_fallthru
        _
    $region6: #{_forward_impl.3} parent=1 // loop_footer
      %s14 = sadd.s32 1, %s10
    $region7: #{_forward_impl.3} parent=1 // loop_footer_branch
      %9 = sbr.rel target = $region3
    $region8: #{_forward_impl.3} parent=1 // loop_exit
      _
    %339 = vsyncpa [#allocation4], 1
    %s340 = scalar_lea.sflag [#allocation4], 1
    %341 = vsyncpa %s340, 1

</llo_original>
